<compile_context>
chip_gen: v5e
topology: v5e:2x2
jax: 0.10.0
libtpu: 0.0.40
codegen_flags: <defaults>
</compile_context>

<pallas_src>
import functools
import math

import jax
import jax.numpy as jnp
import numpy as np
from jax import lax
from jax.experimental import pallas as pl
from jax.experimental.pallas import tpu as pltpu


def _scconv_kernel(x_ref, vecs_ref, gmat_ref, lane_mask_ref, tap_mask_ref,
                   w_sq1_ref, w_sq2_ref, w_gwc_ref, w_y2_ref,
                   o_ref, stack_ref,
                   *, C, W, HW, HWp, G, up_ch, cin, thr_logit, eps, padded,
                   mm_dtype):
    f32 = jnp.float32

    # Resident parameters (constant block index -> fetched once by Pallas).
    vecs = vecs_ref[...]                    # (C, 4): [gn_w, gn_b, w_gamma, b_gwc]
    gw = vecs[:, 0:1]
    gb = vecs[:, 1:2]
    w_gamma = vecs[:, 2:3]
    b_gwc = vecs[:, 3:4]
    A = gmat_ref[...]                       # (C, C) same-group indicator
    lane_mask = lane_mask_ref[...]          # (1, HWp); all ones if not padded

    n_g = (C // G) * HW
    inv_ng = 1.0 / n_g
    inv_ng1 = 1.0 / (n_g - 1)
    inv_hw = 1.0 / HW
    half = C // 2

    x = x_ref[0].astype(f32)                # (C, HWp); pad lanes are zero

    # ------- SRU: GroupBatchnorm2d ---------------------------------------
    # Single-pass stats: lane sums of x and x^2 (zero pad lanes drop out),
    # then ONE (C,C)@(C,2) group matmul instead of two matvecs.
    sum_x = jnp.sum(x, axis=1, keepdims=True)
    sum_x2 = jnp.sum(x * x, axis=1, keepdims=True)
    stats = jnp.dot(A, jnp.concatenate([sum_x, sum_x2], axis=1),
                    preferred_element_type=f32)                   # (C, 2)
    mean_c = stats[:, 0:1] * inv_ng
    var_c = jnp.maximum((stats[:, 1:2] - n_g * mean_c * mean_c) * inv_ng1, 0.0)
    inv_std = 1.0 / (jnp.sqrt(var_c) + eps)
    gn_x = (x - mean_c) * (inv_std * gw) + gb

    # ------- SRU: gating + reconstruct ------------------------------------
    # sigmoid(z) >= thr  <=>  z >= logit(thr): no full-tile exp needed.
    info = (gn_x * w_gamma) >= thr_logit
    x1 = jnp.where(info, gn_x, 0.0)
    x2 = gn_x - x1                          # exact complement of the gate
    if C % 8 == 0:
        xs = x1 + pltpu.roll(x2, shift=half, axis=0)   # sublane half-swap (XLU)
    else:
        xs = jnp.concatenate([x1[:half] + x2[half:],
                              x1[half:] + x2[:half]], axis=0)

    # ------- CRU -----------------------------------------------------------
    up_s = jnp.dot(w_sq1_ref[...], xs[:up_ch].astype(mm_dtype),
                   preferred_element_type=f32)                    # (cin, HWp)
    low_s = jnp.dot(w_sq2_ref[...], xs[up_ch:].astype(mm_dtype),
                    preferred_element_type=f32)                   # (low_s_ch, HWp)

    # GWC (+ folded PWC1): write the 9 rolled + boundary-masked taps straight
    # into the VMEM scratch slab, then one (C, 9*cin) @ (9*cin, HWp) matmul.
    shifts = [(ky - 1) * W + (kx - 1) for ky in range(3) for kx in range(3)]
    for ti, s in enumerate(shifts):
        rolled = up_s if s == 0 else pltpu.roll(up_s, shift=(-s) % HWp, axis=1)
        stack_ref[ti * cin:(ti + 1) * cin, :] = (
            rolled * tap_mask_ref[ti]).astype(mm_dtype)
    y1 = jnp.dot(w_gwc_ref[...], stack_ref[...],
                 preferred_element_type=f32) + b_gwc              # (C, HWp)
    # y2 = [PWC2(low_s); low_s]: identity folded into w_y2 -> single matmul.
    y2 = jnp.dot(w_y2_ref[...], low_s.astype(mm_dtype),
                 preferred_element_type=f32)                      # (C, HWp)

    # ------- channel softmax on pooled [y1; y2] (no (2C,HW) temporary) -----
    if padded:
        p1 = jnp.sum(y1 * lane_mask, axis=1, keepdims=True) * inv_hw
        p2 = jnp.sum(y2 * lane_mask, axis=1, keepdims=True) * inv_hw
    else:
        p1 = jnp.sum(y1, axis=1, keepdims=True) * inv_hw
        p2 = jnp.sum(y2, axis=1, keepdims=True) * inv_hw
    m = jnp.maximum(jnp.max(p1), jnp.max(p2))
    e1 = jnp.exp(p1 - m)
    e2 = jnp.exp(p2 - m)
    inv_den = 1.0 / (jnp.sum(e1) + jnp.sum(e2))
    out = y1 * (e1 * inv_den) + y2 * (e2 * inv_den)
    if padded:
        out = out * lane_mask               # keep pad lanes of the HBM buffer clean
    o_ref[0] = out.astype(o_ref.dtype)


def scconv_pallas(x_nchw, params, *, group_num=4, gate_threshold=0.5,
                  eps=1e-10, alpha=0.5, squeeze_radio=2, group_size=2,
                  use_bf16=False):
    N, C, H, W = x_nchw.shape
    HW = H * W
    HWp = ((HW + 127) // 128) * 128          # lane-dense spatial dimension
    padded = HWp != HW
    up_ch = int(alpha * C)
    low_ch = C - up_ch
    up_s_ch = up_ch // squeeze_radio
    low_s_ch = low_ch // squeeze_radio
    cin = up_s_ch

    assert 0.0 < gate_threshold < 1.0, "gate_threshold must be in (0, 1)"
    # TODO(synk): groups splitting mid-channel (C % group_num != 0) would need a
    # per-element group map; the (C,C) indicator trick assumes channel-aligned
    # groups (the standard ScConv configuration).
    assert C % group_num == 0 and C >= group_num
    assert (C // group_num) * HW > 1, "degenerate group (unbiased var needs n>1)"
    assert C % group_size == 0 and up_s_ch % group_size == 0

    in_dtype = jnp.bfloat16 if use_bf16 else jnp.float32
    mm_dtype = jnp.bfloat16 if use_bf16 else jnp.float32

    # ---- parameter prep (host side) --------------------------------------
    gn_w = params["gn_w"].reshape(C, 1).astype(jnp.float32)
    gn_b = params["gn_b"].reshape(C, 1).astype(jnp.float32)
    w_gamma = gn_w / jnp.sum(gn_w)           # precomputed once, not per step
    b_gwc = params["b_gwc"].reshape(C, 1).astype(jnp.float32)
    vecs = jnp.concatenate([gn_w, gn_b, w_gamma, b_gwc], axis=1)      # (C, 4)

    gid = jnp.arange(C) // (C // group_num)
    gmat = (gid[:, None] == gid[None, :]).astype(jnp.float32)         # (C, C)

    w_sq1 = params["w_sq1"].astype(mm_dtype)          # (cin, up_ch)
    w_sq2 = params["w_sq2"].astype(mm_dtype)          # (low_s_ch, low_ch)

    # Grouped 3x3 conv -> 9 dense block-diagonal (C, cin) tap matrices fused
    # into one (C, 9*cin) matrix; PWC1 is folded into the centre tap.
    cin_g = cin // group_size
    cout_g = C // group_size
    w_gwc_raw = params["w_gwc"].astype(jnp.float32)    # (C, cin_g, 3, 3)
    taps = jnp.zeros((3, 3, C, cin), jnp.float32)
    for g in range(group_size):
        blk = jnp.transpose(w_gwc_raw[g * cout_g:(g + 1) * cout_g], (2, 3, 0, 1))
        taps = taps.at[:, :, g * cout_g:(g + 1) * cout_g,
                       g * cin_g:(g + 1) * cin_g].set(blk)
    taps = taps.reshape(9, C, cin)
    taps = taps.at[4].add(params["w_pwc1"].astype(jnp.float32))   # centre tap
    w_gwc_fused = jnp.transpose(taps, (1, 0, 2)).reshape(C, 9 * cin)
    w_gwc_fused = w_gwc_fused.astype(mm_dtype)

    # cat([PWC2(low), low]) folded into a single weight [w_pwc2; I].
    w_y2 = jnp.concatenate(
        [params["w_pwc2"].astype(jnp.float32),
         jnp.eye(low_s_ch, dtype=jnp.float32)], axis=0).astype(mm_dtype)

    # Conv boundary masks (one per tap) and the pad-lane mask, host-precomputed.
    idx = np.arange(HWp)
    col = idx % W
    tap_masks = np.zeros((9, 1, HWp), np.float32)
    ti = 0
    for ky in range(3):
        for kx in range(3):
            oy, ox = ky - 1, kx - 1
            s = oy * W + ox
            valid = ((idx < HW) & (idx + s >= 0) & (idx + s < HW)
                     & (col + ox >= 0) & (col + ox < W))
            tap_masks[ti, 0] = valid.astype(np.float32)
            ti += 1
    tap_masks = jnp.asarray(tap_masks)
    lane_mask = jnp.asarray((idx < HW).astype(np.float32).reshape(1, HWp))

    # HBM boundary: optional bf16 (halves HBM traffic on mem-bound v5e/v6e);
    # the cast and pad fuse into one wrapper-side XLA op.
    x2 = x_nchw.reshape(N, C, HW).astype(in_dtype)
    if padded:
        x2 = jnp.pad(x2, ((0, 0), (0, 0), (0, HWp - HW)))

    # ---- VMEM budget (generation aware) -----------------------------------
    item = jnp.dtype(in_dtype).itemsize
    mm_item = jnp.dtype(mm_dtype).itemsize
    blk = C * HWp
    est = (4 * blk * item                      # double-buffered in/out blocks
           + 16 * blk * 4                      # f32 temporaries in the body
           + 2 * 9 * cin * HWp * mm_item       # tap scratch (+ headroom)
           + 2 * 4 * (C * C + 10 * HWp + 4 * C + up_s_ch * up_ch
                      + low_s_ch * low_ch + C * 9 * cin + C * low_s_ch)
           + (2 << 20))
    vmem_cap = 64 << 20                        # conservative default (v7x/TC)
    try:
        vmem_cap = int(getattr(pltpu.get_tpu_info(), "vmem_capacity_bytes",
                               vmem_cap))
    except Exception:
        pass
    vmem_limit = int(min(max(est, 32 << 20), (vmem_cap * 3) // 4))

    kernel = functools.partial(
        _scconv_kernel, C=C, W=W, HW=HW, HWp=HWp, G=group_num, up_ch=up_ch,
        cin=cin,
        thr_logit=float(math.log(gate_threshold) - math.log1p(-gate_threshold)),
        eps=eps, padded=padded, mm_dtype=mm_dtype)

    def resident(arr):
        nd = arr.ndim
        return pl.BlockSpec(arr.shape, lambda n, _nd=nd: (0,) * _nd)

    out = pl.pallas_call(
        kernel,
        out_shape=jax.ShapeDtypeStruct((N, C, HWp), in_dtype),
        grid_spec=pltpu.PrefetchScalarGridSpec(
            num_scalar_prefetch=0,
            grid=(N,),                         # batch on the grid
            in_specs=[
                pl.BlockSpec((1, C, HWp), lambda n: (n, 0, 0)),      # x
                resident(vecs), resident(gmat), resident(lane_mask),
                resident(tap_masks), resident(w_sq1), resident(w_sq2),
                resident(w_gwc_fused), resident(w_y2),
            ],
            out_specs=pl.BlockSpec((1, C, HWp), lambda n: (n, 0, 0)),
            scratch_shapes=[pltpu.VMEM((9 * cin, HWp), mm_dtype)],
        ),
        compiler_params=pltpu.CompilerParams(
            dimension_semantics=("parallel",),  # megacore / 2-TC sharding
            vmem_limit_bytes=vmem_limit),
    )(x2, vecs, gmat, lane_mask, tap_masks, w_sq1, w_sq2, w_gwc_fused, w_y2)

    if padded:
        out = out[:, :, :HW]
    return out.reshape(N, C, H, W)


def scconv_ref(x, params, *, group_num=4, gate_threshold=0.5, eps=1e-10,
               alpha=0.5, squeeze_radio=2, group_size=2):
    """Pure-JAX reference matching the PyTorch forward pass (for validation)."""
    N, C, H, W = x.shape
    up_ch = int(alpha * C)
    gn_w = params["gn_w"]
    gn_b = params["gn_b"]
    xr = x.reshape(N, group_num, -1)
    mean = xr.mean(axis=2, keepdims=True)
    std = jnp.std(xr, axis=2, keepdims=True, ddof=1)
    xn = ((xr - mean) / (std + eps)).reshape(N, C, H, W)
    gn_x = xn * gn_w.reshape(1, C, 1, 1) + gn_b.reshape(1, C, 1, 1)
    w_gamma = (gn_w / gn_w.sum()).reshape(1, C, 1, 1)
    rew = jax.nn.sigmoid(gn_x * w_gamma)
    info = rew >= gate_threshold
    x1 = jnp.where(info, gn_x, 0.0)
    x2 = jnp.where(~info, gn_x, 0.0)
    half = C // 2
    xs = jnp.concatenate(
        [x1[:, :half] + x2[:, half:], x1[:, half:] + x2[:, :half]], axis=1)

    up, low = xs[:, :up_ch], xs[:, up_ch:]
    conv1 = lambda z, w: jnp.einsum("oc,nchw->nohw", w, z)
    up_s = conv1(up, params["w_sq1"])
    low_s = conv1(low, params["w_sq2"])
    gwc = lax.conv_general_dilated(
        up_s, params["w_gwc"], window_strides=(1, 1), padding="SAME",
        feature_group_count=group_size,
        dimension_numbers=("NCHW", "OIHW", "NCHW")) + params["b_gwc"].reshape(1, C, 1, 1)
    y1 = gwc + conv1(up_s, params["w_pwc1"])
    y2 = jnp.concatenate([conv1(low_s, params["w_pwc2"]), low_s], axis=1)
    out = jnp.concatenate([y1, y2], axis=1)
    pooled = out.mean(axis=(2, 3), keepdims=True)
    out = jax.nn.softmax(pooled, axis=1) * out
    return out[:, :C] + out[:, C:]


if __name__ == "__main__":
    def run_case(N, C, H, W, seed, use_bf16=False, rtol=1e-4, atol=1e-4):
        group_num, alpha, squeeze_radio, group_size = 4, 0.5, 2, 2
        up_ch = int(alpha * C)
        low_ch = C - up_ch
        up_s_ch = up_ch // squeeze_radio
        low_s_ch = low_ch // squeeze_radio

        key = jax.random.PRNGKey(seed)
        k = jax.random.split(key, 9)
        params = dict(
            gn_w=jax.random.uniform(k[0], (C,), jnp.float32, 0.5, 1.5),
            gn_b=0.05 * jax.random.normal(k[1], (C,), jnp.float32),
            w_sq1=0.3 * jax.random.normal(k[2], (up_s_ch, up_ch), jnp.float32),
            w_sq2=0.3 * jax.random.normal(k[3], (low_s_ch, low_ch), jnp.float32),
            w_gwc=0.3 * jax.random.normal(
                k[4], (C, up_s_ch // group_size, 3, 3), jnp.float32),
            b_gwc=0.1 * jax.random.normal(k[5], (C,), jnp.float32),
            w_pwc1=0.3 * jax.random.normal(k[6], (C, up_s_ch), jnp.float32),
            w_pwc2=0.3 * jax.random.normal(k[7], (C - low_s_ch, low_s_ch),
                                           jnp.float32),
        )
        x = jax.random.normal(k[8], (N, C, H, W), jnp.float32)

        out = scconv_pallas(x, params, group_num=group_num, alpha=alpha,
                            squeeze_radio=squeeze_radio, group_size=group_size,
                            use_bf16=use_bf16)
        out = jax.block_until_ready(out)
        ref = scconv_ref(x, params, group_num=group_num, alpha=alpha,
                         squeeze_radio=squeeze_radio, group_size=group_size)
        assert out.shape == (N, C, H, W)
        np.testing.assert_allclose(np.asarray(out.astype(jnp.float32)),
                                   np.asarray(ref), rtol=rtol, atol=atol)

    # f32, lane-dense spatial (HW = 256), grid carries the 2 batch elements.
    run_case(2, 8, 16, 16, 0)
    # f32, padded-lane case (HW = 36 -> 128): exercises lane/boundary masks.
    run_case(2, 8, 6, 6, 1)
    # bf16 at the HBM/MXU boundary (v5e/v6e traffic optimisation), looser tol.
    run_case(2, 8, 16, 16, 2, use_bf16=True, rtol=2e-2, atol=2e-2)
    # Slightly larger config: C = 16 (aligned half-swap), batch 4 on the grid.
    run_case(4, 16, 16, 16, 3)
    print("KERNEL_OK")
</pallas_src>

<mosaic_0001>
module attributes {stable_mosaic.version = 11 : i64} {
  func.func @_scconv_kernel(%arg0: i32, %arg1: memref<1x8x256xf32, #tpu.memory_space<vmem>>, %arg2: memref<8x4xf32, #tpu.memory_space<vmem>>, %arg3: memref<8x8xf32, #tpu.memory_space<vmem>>, %arg4: memref<1x256xf32, #tpu.memory_space<vmem>>, %arg5: memref<9x1x256xf32, #tpu.memory_space<vmem>>, %arg6: memref<2x4xf32, #tpu.memory_space<vmem>>, %arg7: memref<2x4xf32, #tpu.memory_space<vmem>>, %arg8: memref<8x18xf32, #tpu.memory_space<vmem>>, %arg9: memref<8x2xf32, #tpu.memory_space<vmem>>, %arg10: memref<1x8x256xf32, #tpu.memory_space<vmem>>, %arg11: memref<18x256xf32, #tpu.memory_space<vmem>>) attributes {dimension_semantics = [#tpu.dimension_semantics<parallel>], iteration_bounds = array<i64: 2>, scalar_prefetch = 0 : i64, scratch_operands = 1 : i64, tpu.core_type = #tpu.core_type<tc>, window_params = [{transform_indices = @transform_0, window_bounds = array<i64: 1, 8, 256>}, {pipeline_mode = #tpu.pipeline_mode<synchronous>, transform_indices = @transform_1, window_bounds = array<i64: 8, 4>}, {pipeline_mode = #tpu.pipeline_mode<synchronous>, transform_indices = @transform_2, window_bounds = array<i64: 8, 8>}, {pipeline_mode = #tpu.pipeline_mode<synchronous>, transform_indices = @transform_3, window_bounds = array<i64: 1, 256>}, {pipeline_mode = #tpu.pipeline_mode<synchronous>, transform_indices = @transform_4, window_bounds = array<i64: 9, 1, 256>}, {pipeline_mode = #tpu.pipeline_mode<synchronous>, transform_indices = @transform_5, window_bounds = array<i64: 2, 4>}, {pipeline_mode = #tpu.pipeline_mode<synchronous>, transform_indices = @transform_6, window_bounds = array<i64: 2, 4>}, {pipeline_mode = #tpu.pipeline_mode<synchronous>, transform_indices = @transform_7, window_bounds = array<i64: 8, 18>}, {pipeline_mode = #tpu.pipeline_mode<synchronous>, transform_indices = @transform_8, window_bounds = array<i64: 8, 2>}, {transform_indices = @transform_9, window_bounds = array<i64: 1, 8, 256>}]} {
    %c0 = arith.constant 0 : index
    %c0_0 = arith.constant 0 : index
    %0 = vector.load %arg2[%c0, %c0_0] : memref<8x4xf32, #tpu.memory_space<vmem>>, vector<8x4xf32>
    %1 = vector.extract_strided_slice %0 {offsets = [0, 0], sizes = [8, 1], strides = [1, 1]} : vector<8x4xf32> to vector<8x1xf32>
    %2 = vector.extract_strided_slice %0 {offsets = [0, 1], sizes = [8, 1], strides = [1, 1]} : vector<8x4xf32> to vector<8x1xf32>
    %3 = vector.extract_strided_slice %0 {offsets = [0, 2], sizes = [8, 1], strides = [1, 1]} : vector<8x4xf32> to vector<8x1xf32>
    %4 = vector.extract_strided_slice %0 {offsets = [0, 3], sizes = [8, 1], strides = [1, 1]} : vector<8x4xf32> to vector<8x1xf32>
    %c0_1 = arith.constant 0 : index
    %c0_2 = arith.constant 0 : index
    %5 = vector.load %arg3[%c0_1, %c0_2] : memref<8x8xf32, #tpu.memory_space<vmem>>, vector<8x8xf32>
    %c0_3 = arith.constant 0 : index
    %c0_4 = arith.constant 0 : index
    %c0_5 = arith.constant 0 : index
    %6 = vector.load %arg1[%c0_3, %c0_4, %c0_5] : memref<1x8x256xf32, #tpu.memory_space<vmem>>, vector<1x8x256xf32>
    %7 = vector.shape_cast %6 : vector<1x8x256xf32> to vector<8x256xf32>
    %cst = arith.constant dense<0.000000e+00> : vector<8xf32>
    %8 = vector.multi_reduction <add>, %7, %cst [1] : vector<8x256xf32> to vector<8xf32>
    %9 = vector.shape_cast %8 : vector<8xf32> to vector<8x1xf32>
    %10 = arith.mulf %7, %7 : vector<8x256xf32>
    %cst_6 = arith.constant dense<0.000000e+00> : vector<8xf32>
    %11 = vector.multi_reduction <add>, %10, %cst_6 [1] : vector<8x256xf32> to vector<8xf32>
    %12 = vector.shape_cast %11 : vector<8xf32> to vector<8x1xf32>
    %13 = tpu.concatenate %9, %12 in 1 : vector<8x1xf32>, vector<8x1xf32> -> vector<8x2xf32>
    %cst_7 = arith.constant dense<0.000000e+00> : vector<8x2xf32>
    %14 = tpu.matmul %5, %13, %cst_7 {dimension_numbers = #tpu.dot_dimension_numbers<[1], [0], [0], [1], [0, 0, 1, 1], [], []>} : vector<8x8xf32>, vector<8x2xf32>, vector<8x2xf32> -> vector<8x2xf32>
    %15 = vector.extract_strided_slice %14 {offsets = [0, 0], sizes = [8, 1], strides = [1, 1]} : vector<8x2xf32> to vector<8x1xf32>
    %cst_8 = arith.constant 0.001953125 : f32
    %16 = vector.broadcast %cst_8 : f32 to vector<8x1xf32>
    %17 = arith.mulf %15, %16 : vector<8x1xf32>
    %18 = vector.extract_strided_slice %14 {offsets = [0, 1], sizes = [8, 1], strides = [1, 1]} : vector<8x2xf32> to vector<8x1xf32>
    %cst_9 = arith.constant 5.120000e+02 : f32
    %19 = vector.broadcast %cst_9 : f32 to vector<8x1xf32>
    %20 = arith.mulf %19, %17 : vector<8x1xf32>
    %21 = arith.mulf %20, %17 : vector<8x1xf32>
    %22 = arith.subf %18, %21 : vector<8x1xf32>
    %cst_10 = arith.constant 0.00195694715 : f32
    %23 = vector.broadcast %cst_10 : f32 to vector<8x1xf32>
    %24 = arith.mulf %22, %23 : vector<8x1xf32>
    %cst_11 = arith.constant 0.000000e+00 : f32
    %25 = vector.broadcast %cst_11 : f32 to vector<8x1xf32>
    %26 = arith.maximumf %24, %25 : vector<8x1xf32>
    %27 = math.sqrt %26 : vector<8x1xf32>
    %cst_12 = arith.constant 1.000000e-10 : f32
    %28 = vector.broadcast %cst_12 : f32 to vector<8x1xf32>
    %29 = arith.addf %27, %28 : vector<8x1xf32>
    %cst_13 = arith.constant 1.000000e+00 : f32
    %30 = vector.broadcast %cst_13 : f32 to vector<8x1xf32>
    %31 = arith.divf %30, %29 : vector<8x1xf32>
    %32 = vector.broadcast %17 : vector<8x1xf32> to vector<8x256xf32>
    %33 = arith.subf %7, %32 : vector<8x256xf32>
    %34 = arith.mulf %31, %1 : vector<8x1xf32>
    %35 = vector.broadcast %34 : vector<8x1xf32> to vector<8x256xf32>
    %36 = arith.mulf %33, %35 : vector<8x256xf32>
    %37 = vector.broadcast %2 : vector<8x1xf32> to vector<8x256xf32>
    %38 = arith.addf %36, %37 : vector<8x256xf32>
    %39 = vector.broadcast %3 : vector<8x1xf32> to vector<8x256xf32>
    %40 = arith.mulf %38, %39 : vector<8x256xf32>
    %cst_14 = arith.constant 0.000000e+00 : f32
    %41 = vector.broadcast %cst_14 : f32 to vector<8x256xf32>
    %42 = arith.cmpf oge, %40, %41 : vector<8x256xf32>
    %cst_15 = arith.constant 0.000000e+00 : f32
    %43 = vector.broadcast %cst_15 : f32 to vector<8x256xf32>
    %44 = arith.select %42, %38, %43 : vector<8x256xi1>, vector<8x256xf32>
    %45 = arith.subf %38, %44 : vector<8x256xf32>
    %c4_i32 = arith.constant 4 : i32
    %46 = tpu.dynamic_rotate %45 by %c4_i32 dim 0 : vector<8x256xf32>, i32 -> vector<8x256xf32>
    %47 = arith.addf %44, %46 : vector<8x256xf32>
    %c0_16 = arith.constant 0 : index
    %c0_17 = arith.constant 0 : index
    %48 = vector.load %arg6[%c0_16, %c0_17] : memref<2x4xf32, #tpu.memory_space<vmem>>, vector<2x4xf32>
    %49 = vector.extract_strided_slice %47 {offsets = [0, 0], sizes = [4, 256], strides = [1, 1]} : vector<8x256xf32> to vector<4x256xf32>
    %cst_18 = arith.constant dense<0.000000e+00> : vector<2x256xf32>
    %50 = tpu.matmul %48, %49, %cst_18 {dimension_numbers = #tpu.dot_dimension_numbers<[1], [0], [0], [1], [0, 0, 1, 1], [], []>} : vector<2x4xf32>, vector<4x256xf32>, vector<2x256xf32> -> vector<2x256xf32>
    %c0_19 = arith.constant 0 : index
    %c0_20 = arith.constant 0 : index
    %51 = vector.load %arg7[%c0_19, %c0_20] : memref<2x4xf32, #tpu.memory_space<vmem>>, vector<2x4xf32>
    %52 = vector.extract_strided_slice %47 {offsets = [4, 0], sizes = [4, 256], strides = [1, 1]} : vector<8x256xf32> to vector<4x256xf32>
    %cst_21 = arith.constant dense<0.000000e+00> : vector<2x256xf32>
    %53 = tpu.matmul %51, %52, %cst_21 {dimension_numbers = #tpu.dot_dimension_numbers<[1], [0], [0], [1], [0, 0, 1, 1], [], []>} : vector<2x4xf32>, vector<4x256xf32>, vector<2x256xf32> -> vector<2x256xf32>
    %c17_i32 = arith.constant 17 : i32
    %54 = tpu.dynamic_rotate %50 by %c17_i32 dim 1 : vector<2x256xf32>, i32 -> vector<2x256xf32>
    %c0_22 = arith.constant 0 : index
    %c0_23 = arith.constant 0 : index
    %c0_24 = arith.constant 0 : index
    %55 = vector.load %arg5[%c0_22, %c0_23, %c0_24] : memref<9x1x256xf32, #tpu.memory_space<vmem>>, vector<1x1x256xf32>
    %56 = vector.shape_cast %55 : vector<1x1x256xf32> to vector<1x256xf32>
    %57 = vector.broadcast %56 : vector<1x256xf32> to vector<2x256xf32>
    %58 = arith.mulf %54, %57 : vector<2x256xf32>
    %c0_25 = arith.constant 0 : index
    %c0_26 = arith.constant 0 : index
    %59 = vector.load %arg11[%c0_25, %c0_26] : memref<18x256xf32, #tpu.memory_space<vmem>>, vector<2x256xf32>
    tpu.vector_store %arg11[%c0_25, %c0_26], %58 {strides = array<i32>} : memref<18x256xf32, #tpu.memory_space<vmem>>, vector<2x256xf32>,
    %c16_i32 = arith.constant 16 : i32
    %60 = tpu.dynamic_rotate %50 by %c16_i32 dim 1 : vector<2x256xf32>, i32 -> vector<2x256xf32>
    %c1 = arith.constant 1 : index
    %c0_27 = arith.constant 0 : index
    %c0_28 = arith.constant 0 : index
    %61 = vector.load %arg5[%c1, %c0_27, %c0_28] : memref<9x1x256xf32, #tpu.memory_space<vmem>>, vector<1x1x256xf32>
    %62 = vector.shape_cast %61 : vector<1x1x256xf32> to vector<1x256xf32>
    %63 = vector.broadcast %62 : vector<1x256xf32> to vector<2x256xf32>
    %64 = arith.mulf %60, %63 : vector<2x256xf32>
    %c2 = arith.constant 2 : index
    %c0_29 = arith.constant 0 : index
    %65 = vector.load %arg11[%c2, %c0_29] : memref<18x256xf32, #tpu.memory_space<vmem>>, vector<2x256xf32>
    tpu.vector_store %arg11[%c2, %c0_29], %64 {strides = array<i32>} : memref<18x256xf32, #tpu.memory_space<vmem>>, vector<2x256xf32>,
    %c15_i32 = arith.constant 15 : i32
    %66 = tpu.dynamic_rotate %50 by %c15_i32 dim 1 : vector<2x256xf32>, i32 -> vector<2x256xf32>
    %c2_30 = arith.constant 2 : index
    %c0_31 = arith.constant 0 : index
    %c0_32 = arith.constant 0 : index
    %67 = vector.load %arg5[%c2_30, %c0_31, %c0_32] : memref<9x1x256xf32, #tpu.memory_space<vmem>>, vector<1x1x256xf32>
    %68 = vector.shape_cast %67 : vector<1x1x256xf32> to vector<1x256xf32>
    %69 = vector.broadcast %68 : vector<1x256xf32> to vector<2x256xf32>
    %70 = arith.mulf %66, %69 : vector<2x256xf32>
    %c4 = arith.constant 4 : index
    %c0_33 = arith.constant 0 : index
    %71 = vector.load %arg11[%c4, %c0_33] : memref<18x256xf32, #tpu.memory_space<vmem>>, vector<2x256xf32>
    tpu.vector_store %arg11[%c4, %c0_33], %70 {strides = array<i32>} : memref<18x256xf32, #tpu.memory_space<vmem>>, vector<2x256xf32>,
    %c1_i32 = arith.constant 1 : i32
    %72 = tpu.dynamic_rotate %50 by %c1_i32 dim 1 : vector<2x256xf32>, i32 -> vector<2x256xf32>
    %c3 = arith.constant 3 : index
    %c0_34 = arith.constant 0 : index
    %c0_35 = arith.constant 0 : index
    %73 = vector.load %arg5[%c3, %c0_34, %c0_35] : memref<9x1x256xf32, #tpu.memory_space<vmem>>, vector<1x1x256xf32>
    %74 = vector.shape_cast %73 : vector<1x1x256xf32> to vector<1x256xf32>
    %75 = vector.broadcast %74 : vector<1x256xf32> to vector<2x256xf32>
    %76 = arith.mulf %72, %75 : vector<2x256xf32>
    %c6 = arith.constant 6 : index
    %c0_36 = arith.constant 0 : index
    %77 = vector.load %arg11[%c6, %c0_36] : memref<18x256xf32, #tpu.memory_space<vmem>>, vector<2x256xf32>
    tpu.vector_store %arg11[%c6, %c0_36], %76 {strides = array<i32>} : memref<18x256xf32, #tpu.memory_space<vmem>>, vector<2x256xf32>,
    %c4_37 = arith.constant 4 : index
    %c0_38 = arith.constant 0 : index
    %c0_39 = arith.constant 0 : index
    %78 = vector.load %arg5[%c4_37, %c0_38, %c0_39] : memref<9x1x256xf32, #tpu.memory_space<vmem>>, vector<1x1x256xf32>
    %79 = vector.shape_cast %78 : vector<1x1x256xf32> to vector<1x256xf32>
    %80 = vector.broadcast %79 : vector<1x256xf32> to vector<2x256xf32>
    %81 = arith.mulf %50, %80 : vector<2x256xf32>
    %c8 = arith.constant 8 : index
    %c0_40 = arith.constant 0 : index
    %82 = vector.load %arg11[%c8, %c0_40] : memref<18x256xf32, #tpu.memory_space<vmem>>, vector<2x256xf32>
    tpu.vector_store %arg11[%c8, %c0_40], %81 {strides = array<i32>} : memref<18x256xf32, #tpu.memory_space<vmem>>, vector<2x256xf32>,
    %c255_i32 = arith.constant 255 : i32
    %83 = tpu.dynamic_rotate %50 by %c255_i32 dim 1 : vector<2x256xf32>, i32 -> vector<2x256xf32>
    %c5 = arith.constant 5 : index
    %c0_41 = arith.constant 0 : index
    %c0_42 = arith.constant 0 : index
    %84 = vector.load %arg5[%c5, %c0_41, %c0_42] : memref<9x1x256xf32, #tpu.memory_space<vmem>>, vector<1x1x256xf32>
    %85 = vector.shape_cast %84 : vector<1x1x256xf32> to vector<1x256xf32>
    %86 = vector.broadcast %85 : vector<1x256xf32> to vector<2x256xf32>
    %87 = arith.mulf %83, %86 : vector<2x256xf32>
    %c10 = arith.constant 10 : index
    %c0_43 = arith.constant 0 : index
    %88 = vector.load %arg11[%c10, %c0_43] : memref<18x256xf32, #tpu.memory_space<vmem>>, vector<2x256xf32>
    tpu.vector_store %arg11[%c10, %c0_43], %87 {strides = array<i32>} : memref<18x256xf32, #tpu.memory_space<vmem>>, vector<2x256xf32>,
    %c241_i32 = arith.constant 241 : i32
    %89 = tpu.dynamic_rotate %50 by %c241_i32 dim 1 : vector<2x256xf32>, i32 -> vector<2x256xf32>
    %c6_44 = arith.constant 6 : index
    %c0_45 = arith.constant 0 : index
    %c0_46 = arith.constant 0 : index
    %90 = vector.load %arg5[%c6_44, %c0_45, %c0_46] : memref<9x1x256xf32, #tpu.memory_space<vmem>>, vector<1x1x256xf32>
    %91 = vector.shape_cast %90 : vector<1x1x256xf32> to vector<1x256xf32>
    %92 = vector.broadcast %91 : vector<1x256xf32> to vector<2x256xf32>
    %93 = arith.mulf %89, %92 : vector<2x256xf32>
    %c12 = arith.constant 12 : index
    %c0_47 = arith.constant 0 : index
    %94 = vector.load %arg11[%c12, %c0_47] : memref<18x256xf32, #tpu.memory_space<vmem>>, vector<2x256xf32>
    tpu.vector_store %arg11[%c12, %c0_47], %93 {strides = array<i32>} : memref<18x256xf32, #tpu.memory_space<vmem>>, vector<2x256xf32>,
    %c240_i32 = arith.constant 240 : i32
    %95 = tpu.dynamic_rotate %50 by %c240_i32 dim 1 : vector<2x256xf32>, i32 -> vector<2x256xf32>
    %c7 = arith.constant 7 : index
    %c0_48 = arith.constant 0 : index
    %c0_49 = arith.constant 0 : index
    %96 = vector.load %arg5[%c7, %c0_48, %c0_49] : memref<9x1x256xf32, #tpu.memory_space<vmem>>, vector<1x1x256xf32>
    %97 = vector.shape_cast %96 : vector<1x1x256xf32> to vector<1x256xf32>
    %98 = vector.broadcast %97 : vector<1x256xf32> to vector<2x256xf32>
    %99 = arith.mulf %95, %98 : vector<2x256xf32>
    %c14 = arith.constant 14 : index
    %c0_50 = arith.constant 0 : index
    %100 = vector.load %arg11[%c14, %c0_50] : memref<18x256xf32, #tpu.memory_space<vmem>>, vector<2x256xf32>
    tpu.vector_store %arg11[%c14, %c0_50], %99 {strides = array<i32>} : memref<18x256xf32, #tpu.memory_space<vmem>>, vector<2x256xf32>,
    %c239_i32 = arith.constant 239 : i32
    %101 = tpu.dynamic_rotate %50 by %c239_i32 dim 1 : vector<2x256xf32>, i32 -> vector<2x256xf32>
    %c8_51 = arith.constant 8 : index
    %c0_52 = arith.constant 0 : index
    %c0_53 = arith.constant 0 : index
    %102 = vector.load %arg5[%c8_51, %c0_52, %c0_53] : memref<9x1x256xf32, #tpu.memory_space<vmem>>, vector<1x1x256xf32>
    %103 = vector.shape_cast %102 : vector<1x1x256xf32> to vector<1x256xf32>
    %104 = vector.broadcast %103 : vector<1x256xf32> to vector<2x256xf32>
    %105 = arith.mulf %101, %104 : vector<2x256xf32>
    %c16 = arith.constant 16 : index
    %c0_54 = arith.constant 0 : index
    %106 = vector.load %arg11[%c16, %c0_54] : memref<18x256xf32, #tpu.memory_space<vmem>>, vector<2x256xf32>
    tpu.vector_store %arg11[%c16, %c0_54], %105 {strides = array<i32>} : memref<18x256xf32, #tpu.memory_space<vmem>>, vector<2x256xf32>,
    %c0_55 = arith.constant 0 : index
    %c0_56 = arith.constant 0 : index
    %107 = vector.load %arg8[%c0_55, %c0_56] : memref<8x18xf32, #tpu.memory_space<vmem>>, vector<8x18xf32>
    %c0_57 = arith.constant 0 : index
    %c0_58 = arith.constant 0 : index
    %108 = vector.load %arg11[%c0_57, %c0_58] : memref<18x256xf32, #tpu.memory_space<vmem>>, vector<18x256xf32>
    %cst_59 = arith.constant dense<0.000000e+00> : vector<8x256xf32>
    %109 = tpu.matmul %107, %108, %cst_59 {dimension_numbers = #tpu.dot_dimension_numbers<[1], [0], [0], [1], [0, 0, 1, 1], [], []>} : vector<8x18xf32>, vector<18x256xf32>, vector<8x256xf32> -> vector<8x256xf32>
    %110 = vector.broadcast %4 : vector<8x1xf32> to vector<8x256xf32>
    %111 = arith.addf %109, %110 : vector<8x256xf32>
    %c0_60 = arith.constant 0 : index
    %c0_61 = arith.constant 0 : index
    %112 = vector.load %arg9[%c0_60, %c0_61] : memref<8x2xf32, #tpu.memory_space<vmem>>, vector<8x2xf32>
    %cst_62 = arith.constant dense<0.000000e+00> : vector<8x256xf32>
    %113 = tpu.matmul %112, %53, %cst_62 {dimension_numbers = #tpu.dot_dimension_numbers<[1], [0], [0], [1], [0, 0, 1, 1], [], []>} : vector<8x2xf32>, vector<2x256xf32>, vector<8x256xf32> -> vector<8x256xf32>
    %cst_63 = arith.constant dense<0.000000e+00> : vector<8xf32>
    %114 = vector.multi_reduction <add>, %111, %cst_63 [1] : vector<8x256xf32> to vector<8xf32>
    %115 = vector.shape_cast %114 : vector<8xf32> to vector<8x1xf32>
    %cst_64 = arith.constant 3.906250e-03 : f32
    %116 = vector.broadcast %cst_64 : f32 to vector<8x1xf32>
    %117 = arith.mulf %115, %116 : vector<8x1xf32>
    %cst_65 = arith.constant dense<0.000000e+00> : vector<8xf32>
    %118 = vector.multi_reduction <add>, %113, %cst_65 [1] : vector<8x256xf32> to vector<8xf32>
    %119 = vector.shape_cast %118 : vector<8xf32> to vector<8x1xf32>
    %cst_66 = arith.constant 3.906250e-03 : f32
    %120 = vector.broadcast %cst_66 : f32 to vector<8x1xf32>
    %121 = arith.mulf %119, %120 : vector<8x1xf32>
    %122 = vector.shape_cast %117 : vector<8x1xf32> to vector<1x8x1xf32>
    %cst_67 = arith.constant dense<0xFF800000> : vector<1xf32>
    %123 = vector.multi_reduction <maximumf>, %122, %cst_67 [1, 2] : vector<1x8x1xf32> to vector<1xf32>
    %124 = vector.shape_cast %123 : vector<1xf32> to vector<1x1x1xf32>
    %125 = vector.extract %124[0, 0, 0] : f32 from vector<1x1x1xf32>
    %126 = vector.shape_cast %121 : vector<8x1xf32> to vector<1x8x1xf32>
    %cst_68 = arith.constant dense<0xFF800000> : vector<1xf32>
    %127 = vector.multi_reduction <maximumf>, %126, %cst_68 [1, 2] : vector<1x8x1xf32> to vector<1xf32>
    %128 = vector.shape_cast %127 : vector<1xf32> to vector<1x1x1xf32>
    %129 = vector.extract %128[0, 0, 0] : f32 from vector<1x1x1xf32>
    %130 = arith.maximumf %125, %129 : f32
    %131 = vector.broadcast %130 : f32 to vector<8x1xf32>
    %132 = arith.subf %117, %131 : vector<8x1xf32>
    %133 = math.exp %132 : vector<8x1xf32>
    %134 = vector.broadcast %130 : f32 to vector<8x1xf32>
    %135 = arith.subf %121, %134 : vector<8x1xf32>
    %136 = math.exp %135 : vector<8x1xf32>
    %137 = vector.shape_cast %133 : vector<8x1xf32> to vector<1x8x1xf32>
    %cst_69 = arith.constant dense<0.000000e+00> : vector<1xf32>
    %138 = vector.multi_reduction <add>, %137, %cst_69 [1, 2] : vector<1x8x1xf32> to vector<1xf32>
    %139 = vector.shape_cast %138 : vector<1xf32> to vector<1x1x1xf32>
    %140 = vector.extract %139[0, 0, 0] : f32 from vector<1x1x1xf32>
    %141 = vector.shape_cast %136 : vector<8x1xf32> to vector<1x8x1xf32>
    %cst_70 = arith.constant dense<0.000000e+00> : vector<1xf32>
    %142 = vector.multi_reduction <add>, %141, %cst_70 [1, 2] : vector<1x8x1xf32> to vector<1xf32>
    %143 = vector.shape_cast %142 : vector<1xf32> to vector<1x1x1xf32>
    %144 = vector.extract %143[0, 0, 0] : f32 from vector<1x1x1xf32>
    %145 = arith.addf %140, %144 : f32
    %cst_71 = arith.constant 1.000000e+00 : f32
    %146 = arith.divf %cst_71, %145 : f32
    %147 = vector.broadcast %146 : f32 to vector<8x1xf32>
    %148 = arith.mulf %133, %147 : vector<8x1xf32>
    %149 = vector.broadcast %148 : vector<8x1xf32> to vector<8x256xf32>
    %150 = arith.mulf %111, %149 : vector<8x256xf32>
    %151 = vector.broadcast %146 : f32 to vector<8x1xf32>
    %152 = arith.mulf %136, %151 : vector<8x1xf32>
    %153 = vector.broadcast %152 : vector<8x1xf32> to vector<8x256xf32>
    %154 = arith.mulf %113, %153 : vector<8x256xf32>
    %155 = arith.addf %150, %154 : vector<8x256xf32>
    %c0_72 = arith.constant 0 : index
    %c0_73 = arith.constant 0 : index
    %c0_74 = arith.constant 0 : index
    %156 = vector.load %arg10[%c0_72, %c0_73, %c0_74] : memref<1x8x256xf32, #tpu.memory_space<vmem>>, vector<1x8x256xf32>
    %157 = vector.shape_cast %156 : vector<1x8x256xf32> to vector<8x256xf32>
    %158 = vector.shape_cast %155 : vector<8x256xf32> to vector<1x8x256xf32>
    tpu.vector_store %arg10[%c0_72, %c0_73, %c0_74], %158 {strides = array<i32>} : memref<1x8x256xf32, #tpu.memory_space<vmem>>, vector<1x8x256xf32>,
    return
  }
  func.func @transform_0(%arg0: i32) -> (i32, i32, i32) {
    %c0_i32 = arith.constant 0 : i32
    %c0_i32_0 = arith.constant 0 : i32
    %c0_i32_1 = arith.constant 0 : i32
    return %arg0, %c0_i32, %c0_i32_0 : i32, i32, i32
  }
  func.func @transform_1(%arg0: i32) -> (i32, i32) {
    %c0_i32 = arith.constant 0 : i32
    %c0_i32_0 = arith.constant 0 : i32
    %c0_i32_1 = arith.constant 0 : i32
    return %c0_i32, %c0_i32_0 : i32, i32
  }
  func.func @transform_2(%arg0: i32) -> (i32, i32) {
    %c0_i32 = arith.constant 0 : i32
    %c0_i32_0 = arith.constant 0 : i32
    %c0_i32_1 = arith.constant 0 : i32
    return %c0_i32, %c0_i32_0 : i32, i32
  }
  func.func @transform_3(%arg0: i32) -> (i32, i32) {
    %c0_i32 = arith.constant 0 : i32
    %c0_i32_0 = arith.constant 0 : i32
    %c0_i32_1 = arith.constant 0 : i32
    return %c0_i32, %c0_i32_0 : i32, i32
  }
  func.func @transform_4(%arg0: i32) -> (i32, i32, i32) {
    %c0_i32 = arith.constant 0 : i32
    %c0_i32_0 = arith.constant 0 : i32
    %c0_i32_1 = arith.constant 0 : i32
    %c0_i32_2 = arith.constant 0 : i32
    return %c0_i32, %c0_i32_0, %c0_i32_1 : i32, i32, i32
  }
  func.func @transform_5(%arg0: i32) -> (i32, i32) {
    %c0_i32 = arith.constant 0 : i32
    %c0_i32_0 = arith.constant 0 : i32
    %c0_i32_1 = arith.constant 0 : i32
    return %c0_i32, %c0_i32_0 : i32, i32
  }
  func.func @transform_6(%arg0: i32) -> (i32, i32) {
    %c0_i32 = arith.constant 0 : i32
    %c0_i32_0 = arith.constant 0 : i32
    %c0_i32_1 = arith.constant 0 : i32
    return %c0_i32, %c0_i32_0 : i32, i32
  }
  func.func @transform_7(%arg0: i32) -> (i32, i32) {
    %c0_i32 = arith.constant 0 : i32
    %c0_i32_0 = arith.constant 0 : i32
    %c0_i32_1 = arith.constant 0 : i32
    return %c0_i32, %c0_i32_0 : i32, i32
  }
  func.func @transform_8(%arg0: i32) -> (i32, i32) {
    %c0_i32 = arith.constant 0 : i32
    %c0_i32_0 = arith.constant 0 : i32
    %c0_i32_1 = arith.constant 0 : i32
    return %c0_i32, %c0_i32_0 : i32, i32
  }
  func.func @transform_9(%arg0: i32) -> (i32, i32, i32) {
    %c0_i32 = arith.constant 0 : i32
    %c0_i32_0 = arith.constant 0 : i32
    %c0_i32_1 = arith.constant 0 : i32
    return %arg0, %c0_i32, %c0_i32_0 : i32, i32, i32
  }
}

</mosaic_0001>

<llo_original>
// kernel: tpu_custom_call.1
$region0: #{tpu_custom_call.1}
  #allocation0 [shape = 'u32[]', space=smem, size = 0x4, offset = 0x4, fixed_abs, tag = 'smem constant byte address 0x4 - core index']
  #allocation1 [shape = 'u32[72,128]{1,0:T(1,128)}', space=vmem, size = 0x9000, scoped, tag = 'internal scratch']
  #allocation2 [shape = 'f32[18,256]{1,0:T(8,128)}', space=vmem, size = 0x6000, scoped, tag = 'scratch operand']
  %s0 = inlined_call_operand.hbm [shape: f32[2,8,256], index: 0, kind: input, shape index: {}]
  %s1 = inlined_call_operand.vmem [shape: f32[8,4], index: 1, kind: input, shape index: {}]
  %s2 = inlined_call_operand.hbm [shape: f32[8,8], index: 2, kind: input, shape index: {}]
  %s3 = inlined_call_operand.hbm [shape: f32[1,256], index: 3, kind: input, shape index: {}]
  %s4 = inlined_call_operand.vmem [shape: f32[9,1,256], index: 4, kind: input, shape index: {}]
  %s5 = inlined_call_operand.hbm [shape: f32[2,4], index: 5, kind: input, shape index: {}]
  %s6 = inlined_call_operand.hbm [shape: f32[2,4], index: 6, kind: input, shape index: {}]
  %s7 = inlined_call_operand.vmem [shape: f32[8,18], index: 7, kind: input, shape index: {}]
  %s8 = inlined_call_operand.vmem [shape: f32[8,2], index: 8, kind: input, shape index: {}]
  %s9 = inlined_call_operand.hbm [shape: f32[2,8,256], index: 9, kind: output, shape index: {}]
  %s10 = sld [smem:[#allocation0]]
  $region89: #{tpu_custom_call.1} parent=0
    _
  %s12 = ssub.s32 1, %s10
  %s13 = scalar_select 0, %s12, %s10
  $region1: #{tpu_custom_call.1} parent=0
    #allocation3 [shape = 'u8[16384]{0}', space=vmem, size = 0x4000, scoped, tag = 'input window, operand 0']
    #allocation4 [shape = 's32[2]{0}', space=sflag, size = 0x8, scoped, tag = 'scoped memory for tpu_custom_call.1']
    #allocation5 [shape = 's32[2]{0}', space=sflag, size = 0x8, scoped, tag = 'scoped memory for tpu_custom_call.1']
    #allocation6 [shape = 'u8[4096]{0}', space=vmem, size = 0x1000, scoped, tag = 'input window, operand 2, single buffered']
    #allocation7 [shape = 's32[1]{0}', space=sflag, size = 0x4, scoped, tag = 'scoped memory for tpu_custom_call.1']
    #allocation8 [shape = 'u8[1024]{0}', space=vmem, size = 0x400, scoped, tag = 'input window, operand 3, single buffered']
    #allocation9 [shape = 'u8[1024]{0}', space=vmem, size = 0x400, scoped, tag = 'input window, operand 5, single buffered']
    #allocation10 [shape = 's32[1]{0}', space=sflag, size = 0x4, scoped, tag = 'scoped memory for tpu_custom_call.1']
    #allocation11 [shape = 'u8[1024]{0}', space=vmem, size = 0x400, scoped, tag = 'input window, operand 6, single buffered']
    #allocation12 [shape = 'u8[16384]{0}', space=vmem, size = 0x4000, scoped, tag = 'output window, operand 0']
    %14 = vsyncpa [#allocation4], 0
    %s15 = scalar_lea.sflag [#allocation4], 1
    %16 = vsyncpa %s15, 0
    %17 = vsyncpa [#allocation7], 0
    %18 = vsyncpa [#allocation10], 0
    %19 = vsyncpa [#allocation5], 0
    %s20 = scalar_lea.sflag [#allocation5], 1
    %21 = vsyncpa %s20, 0
    loop: start=0, step=1, limit=4
    $region2: #{tpu_custom_call.1} parent=1 // loop_pre_header
      _
    $region3: #{tpu_custom_call.1} parent=1 // loop_header
      %s23 = sphi 0, %s27
      %p24 = scmp.ge.s32.totalorder %s23, 4
      %s33 = sphi 0, %s35
      %s36 = sphi 0, %s33
      %s37 = sphi 0, %s36
      %s53 = sphi 0, %s37
      %s57 = sphi 0, %s57
      %s59 = sphi 0, %s57
      %s60 = sphi 0, %s59
      %s74 = sphi 0, %s60
      %s78 = sphi 0, %s78
      %s80 = sphi 0, %s78
      %s81 = sphi 0, %s80
      %s95 = sphi 0, %s81
      %s99 = sphi 0, %s99
      %s101 = sphi 0, %s99
      %s102 = sphi 0, %s101
      %s116 = sphi 0, %s102
      %s120 = sphi 0, %s120
      %s122 = sphi 0, %s120
      %s123 = sphi 0, %s122
      %s137 = sphi 0, %s123
      %s141 = sphi 0, %s141
      %s143 = sphi 0, %s141
      %s144 = sphi 0, %s143
      %s158 = sphi 0, %s144
      %s162 = sphi 0, %s162
      %s164 = sphi 0, %s162
      %s165 = sphi 0, %s164
      %s179 = sphi 0, %s165
      %s183 = sphi 0, %s183
      %s185 = sphi 0, %s183
      %s186 = sphi 0, %s185
      %s200 = sphi 0, %s186
      %s204 = sphi 0, %s204
      %s206 = sphi 0, %s204
      %s207 = sphi 0, %s206
      %s221 = sphi 0, %s207
      %s227 = sphi 0, %s229
      %s230 = sphi 0, %s227
      %s231 = sphi 0, %s230
      %s247 = sphi 0, %s231
    $region4: #{tpu_custom_call.1} parent=1 // loop_header_branch
      %26 = sbr.rel (%p24) target = $region8
    $region5: #{tpu_custom_call.1} parent=1 // loop_body
      %s28 = ssub.s32 %s23, 1
      %s29 = ssub.s32 %s23, 2
      %s30 = sadd.s32 %s23, 1
      %s31 = ssub.s32 %s23, %s30
      %p32 = scmp.eq.s32.totalorder %s31, 0
      %s34 = sadd.s32 %s33, 1
      %s35 = scalar_select %p32, %s33, %s34
      %p38 = pneg %p32
      %p39 = scmp.eq.s32.totalorder %s23, 1
      %p40 = por %p38, %p39
      %p41 = scmp.ne.s32.totalorder %s33, %s36
      %p42 = scmp.eq.s32.totalorder %s23, 0
      %p43 = por %p41, %p42
      %p44 = scmp.ne.s32.totalorder %s33, %s36
      %p45 = scmp.eq.s32.totalorder %s28, 1
      %p46 = por %p44, %p45
      %p47 = scmp.ne.s32.totalorder %s36, %s37
      %p48 = scmp.eq.s32.totalorder %s28, 0
      %p49 = por %p47, %p48
      %p50 = scmp.ne.s32.totalorder %s36, %s37
      %p51 = scmp.eq.s32.totalorder %s29, 1
      %p52 = por %p50, %p51
      %p54 = scmp.ne.s32.totalorder %s37, %s53
      %p55 = scmp.eq.s32.totalorder %s29, 0
      %p56 = por %p54, %p55
      %s58 = sadd.s32 %s57, 1
      %p61 = scmp.eq.s32.totalorder %s23, 1
      %p62 = scmp.ne.s32.totalorder %s57, %s59
      %p63 = scmp.eq.s32.totalorder %s23, 0
      %p64 = por %p62, %p63
      %p65 = scmp.ne.s32.totalorder %s57, %s59
      %p66 = scmp.eq.s32.totalorder %s28, 1
      %p67 = por %p65, %p66
      %p68 = scmp.ne.s32.totalorder %s59, %s60
      %p69 = scmp.eq.s32.totalorder %s28, 0
      %p70 = por %p68, %p69
      %p71 = scmp.ne.s32.totalorder %s59, %s60
      %p72 = scmp.eq.s32.totalorder %s29, 1
      %p73 = por %p71, %p72
      %p75 = scmp.ne.s32.totalorder %s60, %s74
      %p76 = scmp.eq.s32.totalorder %s29, 0
      %p77 = por %p75, %p76
      %s79 = sadd.s32 %s78, 1
      %p82 = scmp.eq.s32.totalorder %s23, 1
      %p83 = scmp.ne.s32.totalorder %s78, %s80
      %p84 = scmp.eq.s32.totalorder %s23, 0
      %p85 = por %p83, %p84
      %p86 = scmp.ne.s32.totalorder %s78, %s80
      %p87 = scmp.eq.s32.totalorder %s28, 1
      %p88 = por %p86, %p87
      %p89 = scmp.ne.s32.totalorder %s80, %s81
      %p90 = scmp.eq.s32.totalorder %s28, 0
      %p91 = por %p89, %p90
      %p92 = scmp.ne.s32.totalorder %s80, %s81
      %p93 = scmp.eq.s32.totalorder %s29, 1
      %p94 = por %p92, %p93
      %p96 = scmp.ne.s32.totalorder %s81, %s95
      %p97 = scmp.eq.s32.totalorder %s29, 0
      %p98 = por %p96, %p97
      %s100 = sadd.s32 %s99, 1
      %p103 = scmp.eq.s32.totalorder %s23, 1
      %p104 = scmp.ne.s32.totalorder %s99, %s101
      %p105 = scmp.eq.s32.totalorder %s23, 0
      %p106 = por %p104, %p105
      %p107 = scmp.ne.s32.totalorder %s99, %s101
      %p108 = scmp.eq.s32.totalorder %s28, 1
      %p109 = por %p107, %p108
      %p110 = scmp.ne.s32.totalorder %s101, %s102
      %p111 = scmp.eq.s32.totalorder %s28, 0
      %p112 = por %p110, %p111
      %p113 = scmp.ne.s32.totalorder %s101, %s102
      %p114 = scmp.eq.s32.totalorder %s29, 1
      %p115 = por %p113, %p114
      %p117 = scmp.ne.s32.totalorder %s102, %s116
      %p118 = scmp.eq.s32.totalorder %s29, 0
      %p119 = por %p117, %p118
      %s121 = sadd.s32 %s120, 1
      %p124 = scmp.eq.s32.totalorder %s23, 1
      %p125 = scmp.ne.s32.totalorder %s120, %s122
      %p126 = scmp.eq.s32.totalorder %s23, 0
      %p127 = por %p125, %p126
      %p128 = scmp.ne.s32.totalorder %s120, %s122
      %p129 = scmp.eq.s32.totalorder %s28, 1
      %p130 = por %p128, %p129
      %p131 = scmp.ne.s32.totalorder %s122, %s123
      %p132 = scmp.eq.s32.totalorder %s28, 0
      %p133 = por %p131, %p132
      %p134 = scmp.ne.s32.totalorder %s122, %s123
      %p135 = scmp.eq.s32.totalorder %s29, 1
      %p136 = por %p134, %p135
      %p138 = scmp.ne.s32.totalorder %s123, %s137
      %p139 = scmp.eq.s32.totalorder %s29, 0
      %p140 = por %p138, %p139
      %s142 = sadd.s32 %s141, 1
      %p145 = scmp.eq.s32.totalorder %s23, 1
      %p146 = scmp.ne.s32.totalorder %s141, %s143
      %p147 = scmp.eq.s32.totalorder %s23, 0
      %p148 = por %p146, %p147
      %p149 = scmp.ne.s32.totalorder %s141, %s143
      %p150 = scmp.eq.s32.totalorder %s28, 1
      %p151 = por %p149, %p150
      %p152 = scmp.ne.s32.totalorder %s143, %s144
      %p153 = scmp.eq.s32.totalorder %s28, 0
      %p154 = por %p152, %p153
      %p155 = scmp.ne.s32.totalorder %s143, %s144
      %p156 = scmp.eq.s32.totalorder %s29, 1
      %p157 = por %p155, %p156
      %p159 = scmp.ne.s32.totalorder %s144, %s158
      %p160 = scmp.eq.s32.totalorder %s29, 0
      %p161 = por %p159, %p160
      %s163 = sadd.s32 %s162, 1
      %p166 = scmp.eq.s32.totalorder %s23, 1
      %p167 = scmp.ne.s32.totalorder %s162, %s164
      %p168 = scmp.eq.s32.totalorder %s23, 0
      %p169 = por %p167, %p168
      %p170 = scmp.ne.s32.totalorder %s162, %s164
      %p171 = scmp.eq.s32.totalorder %s28, 1
      %p172 = por %p170, %p171
      %p173 = scmp.ne.s32.totalorder %s164, %s165
      %p174 = scmp.eq.s32.totalorder %s28, 0
      %p175 = por %p173, %p174
      %p176 = scmp.ne.s32.totalorder %s164, %s165
      %p177 = scmp.eq.s32.totalorder %s29, 1
      %p178 = por %p176, %p177
      %p180 = scmp.ne.s32.totalorder %s165, %s179
      %p181 = scmp.eq.s32.totalorder %s29, 0
      %p182 = por %p180, %p181
      %s184 = sadd.s32 %s183, 1
      %p187 = scmp.eq.s32.totalorder %s23, 1
      %p188 = scmp.ne.s32.totalorder %s183, %s185
      %p189 = scmp.eq.s32.totalorder %s23, 0
      %p190 = por %p188, %p189
      %p191 = scmp.ne.s32.totalorder %s183, %s185
      %p192 = scmp.eq.s32.totalorder %s28, 1
      %p193 = por %p191, %p192
      %p194 = scmp.ne.s32.totalorder %s185, %s186
      %p195 = scmp.eq.s32.totalorder %s28, 0
      %p196 = por %p194, %p195
      %p197 = scmp.ne.s32.totalorder %s185, %s186
      %p198 = scmp.eq.s32.totalorder %s29, 1
      %p199 = por %p197, %p198
      %p201 = scmp.ne.s32.totalorder %s186, %s200
      %p202 = scmp.eq.s32.totalorder %s29, 0
      %p203 = por %p201, %p202
      %s205 = sadd.s32 %s204, 1
      %p208 = scmp.eq.s32.totalorder %s23, 1
      %p209 = scmp.ne.s32.totalorder %s204, %s206
      %p210 = scmp.eq.s32.totalorder %s23, 0
      %p211 = por %p209, %p210
      %p212 = scmp.ne.s32.totalorder %s204, %s206
      %p213 = scmp.eq.s32.totalorder %s28, 1
      %p214 = por %p212, %p213
      %p215 = scmp.ne.s32.totalorder %s206, %s207
      %p216 = scmp.eq.s32.totalorder %s28, 0
      %p217 = por %p215, %p216
      %p218 = scmp.ne.s32.totalorder %s206, %s207
      %p219 = scmp.eq.s32.totalorder %s29, 1
      %p220 = por %p218, %p219
      %p222 = scmp.ne.s32.totalorder %s207, %s221
      %p223 = scmp.eq.s32.totalorder %s29, 0
      %p224 = por %p222, %p223
      %s225 = ssub.s32 %s23, %s30
      %p226 = scmp.eq.s32.totalorder %s225, 0
      %s228 = sadd.s32 %s227, 1
      %s229 = scalar_select %p226, %s227, %s228
      %p232 = pneg %p226
      %p233 = scmp.eq.s32.totalorder %s23, 1
      %p234 = por %p232, %p233
      %p235 = scmp.ne.s32.totalorder %s227, %s230
      %p236 = scmp.eq.s32.totalorder %s23, 0
      %p237 = por %p235, %p236
      %p238 = scmp.ne.s32.totalorder %s227, %s230
      %p239 = scmp.eq.s32.totalorder %s28, 1
      %p240 = por %p238, %p239
      %p241 = scmp.ne.s32.totalorder %s230, %s231
      %p242 = scmp.eq.s32.totalorder %s28, 0
      %p243 = por %p241, %p242
      %p244 = scmp.ne.s32.totalorder %s230, %s231
      %p245 = scmp.eq.s32.totalorder %s29, 1
      %p246 = por %p244, %p245
      %p248 = scmp.ne.s32.totalorder %s231, %s247
      %p249 = scmp.eq.s32.totalorder %s29, 0
      %p250 = por %p248, %p249
      %p251 = scmp.le.s32.totalorder 1, %s23
      %p252 = scmp.lt.s32.totalorder %s23, 3
      %p253 = pnand %p251, %p252
      %p254 = pneg %p253
      // Predicated region
      $region9: #{tpu_custom_call.1} parent=5 // pred_check
        _
      $region10: #{tpu_custom_call.1} parent=5 // pred_check_branch
        %256 = sbr.rel (%p253) target = $region12
      $region11: #{tpu_custom_call.1} parent=5 // pred_region
        %s257 = ssub.s32 %s23, 1
        // Predicated region
        $region13: #{tpu_custom_call.1} parent=11 // pred_check
          %p258 = pneg %p70
        $region14: #{tpu_custom_call.1} parent=11 // pred_check_branch
          %260 = sbr.rel (%p258) target = $region16
        $region15: #{tpu_custom_call.1} parent=11 // pred_region
          _
        $region16: #{tpu_custom_call.1} parent=11 // pred_fallthru
          _
        // Predicated region
        $region17: #{tpu_custom_call.1} parent=11 // pred_check
          %p261 = pneg %p91
        $region18: #{tpu_custom_call.1} parent=11 // pred_check_branch
          %263 = sbr.rel (%p261) target = $region20
        $region19: #{tpu_custom_call.1} parent=11 // pred_region
          %265 = vsyncadd [#allocation7], 0
          %s267 = sshll.u32 %s2, 4
          %s268 = int_to_ptr.hbm [resolvable:$true] %s267
          %s269 = sshll.u32 [#allocation6], 4
          %s270 = int_to_ptr.vmem [resolvable:$true] %s269
          %272 = dma.hbm_to_vmem [thread:$0]  %s268, 128, %s270, [#allocation7]
        $region20: #{tpu_custom_call.1} parent=11 // pred_fallthru
          _
        // Predicated region
        $region21: #{tpu_custom_call.1} parent=11 // pred_check
          %p273 = pneg %p112
        $region22: #{tpu_custom_call.1} parent=11 // pred_check_branch
          %275 = sbr.rel (%p273) target = $region24
        $region23: #{tpu_custom_call.1} parent=11 // pred_region
          %277 = vsyncadd [#allocation7], 0
          %s279 = sshll.u32 %s3, 4
          %s280 = int_to_ptr.hbm [resolvable:$true] %s279
          %s281 = sshll.u32 [#allocation8], 4
          %s282 = int_to_ptr.vmem [resolvable:$true] %s281
          %284 = dma.hbm_to_vmem [thread:$0]  %s280, 32, %s282, [#allocation7]
        $region24: #{tpu_custom_call.1} parent=11 // pred_fallthru
          _
        // Predicated region
        $region25: #{tpu_custom_call.1} parent=11 // pred_check
          %p285 = pneg %p133
        $region26: #{tpu_custom_call.1} parent=11 // pred_check_branch
          %287 = sbr.rel (%p285) target = $region28
        $region27: #{tpu_custom_call.1} parent=11 // pred_region
          _
        $region28: #{tpu_custom_call.1} parent=11 // pred_fallthru
          _
        // Predicated region
        $region29: #{tpu_custom_call.1} parent=11 // pred_check
          %p288 = pneg %p154
        $region30: #{tpu_custom_call.1} parent=11 // pred_check_branch
          %290 = sbr.rel (%p288) target = $region32
        $region31: #{tpu_custom_call.1} parent=11 // pred_region
          %292 = vsyncadd [#allocation10], 0
          %s294 = sshll.u32 %s5, 4
          %s295 = int_to_ptr.hbm [resolvable:$true] %s294
          %s296 = sshll.u32 [#allocation9], 4
          %s297 = int_to_ptr.vmem [resolvable:$true] %s296
          %299 = dma.hbm_to_vmem [thread:$0]  %s295, 32, %s297, [#allocation10]
        $region32: #{tpu_custom_call.1} parent=11 // pred_fallthru
          _
        // Predicated region
        $region33: #{tpu_custom_call.1} parent=11 // pred_check
          %p300 = pneg %p175
        $region34: #{tpu_custom_call.1} parent=11 // pred_check_branch
          %302 = sbr.rel (%p300) target = $region36
        $region35: #{tpu_custom_call.1} parent=11 // pred_region
          %304 = vsyncadd [#allocation10], 0
          %s306 = sshll.u32 %s6, 4
          %s307 = int_to_ptr.hbm [resolvable:$true] %s306
          %s308 = sshll.u32 [#allocation11], 4
          %s309 = int_to_ptr.vmem [resolvable:$true] %s308
          %311 = dma.hbm_to_vmem [thread:$0]  %s307, 32, %s309, [#allocation10]
        $region36: #{tpu_custom_call.1} parent=11 // pred_fallthru
          _
        // Predicated region
        $region37: #{tpu_custom_call.1} parent=11 // pred_check
          %p312 = pneg %p196
        $region38: #{tpu_custom_call.1} parent=11 // pred_check_branch
          %314 = sbr.rel (%p312) target = $region40
        $region39: #{tpu_custom_call.1} parent=11 // pred_region
          _
        $region40: #{tpu_custom_call.1} parent=11 // pred_fallthru
          _
        // Predicated region
        $region41: #{tpu_custom_call.1} parent=11 // pred_check
          %p315 = pneg %p217
        $region42: #{tpu_custom_call.1} parent=11 // pred_check_branch
          %317 = sbr.rel (%p315) target = $region44
        $region43: #{tpu_custom_call.1} parent=11 // pred_region
          _
        $region44: #{tpu_custom_call.1} parent=11 // pred_fallthru
          _
      $region12: #{tpu_custom_call.1} parent=5 // pred_fallthru
        _
      %p318 = scmp.lt.s32.totalorder %s23, 2
      // Predicated region
      $region45: #{tpu_custom_call.1} parent=5 // pred_check
        %p319 = pneg %p318
      $region46: #{tpu_custom_call.1} parent=5 // pred_check_branch
        %321 = sbr.rel (%p319) target = $region48
      $region47: #{tpu_custom_call.1} parent=5 // pred_region
        // Predicated region
        $region49: #{tpu_custom_call.1} parent=47 // pred_check
          %p322 = pneg %p43
        $region50: #{tpu_custom_call.1} parent=47 // pred_check_branch
          %324 = sbr.rel (%p322) target = $region52
        $region51: #{tpu_custom_call.1} parent=47 // pred_region
          %s325 = sand.u32 %s33, 1
          %s326 = scalar_lea.sflag [#allocation4], %s325
          %s327 = sand.u32 %s33, 1
          %s328 = smul.addr %s327, 16
          %s329 = scalar_lea.vmem [#allocation3], %s328
          %331 = vsyncadd %s326, 0
          %s332 = smul.addr %s23, 2
          %s333 = smul.addr %s332, 8
          %s334 = scalar_lea.hbm %s0, %s333
          %s336 = sshll.u32 %s334, 4
          %s337 = int_to_ptr.hbm [resolvable:$true] %s336
          %s338 = sshll.u32 %s329, 4
          %s339 = int_to_ptr.vmem [resolvable:$true] %s338
          %341 = dma.hbm_to_vmem [thread:$0]  %s337, 256, %s339, %s326
        $region52: #{tpu_custom_call.1} parent=47 // pred_fallthru
          _
      $region48: #{tpu_custom_call.1} parent=5 // pred_fallthru
        _
      %p342 = scmp.le.s32.totalorder 1, %s23
      %p343 = scmp.lt.s32.totalorder %s23, 3
      %p344 = pnand %p342, %p343
      %p345 = pneg %p344
      // Predicated region
      $region53: #{tpu_custom_call.1} parent=5 // pred_check
        _
      $region54: #{tpu_custom_call.1} parent=5 // pred_check_branch
        %347 = sbr.rel (%p344) target = $region56
      $region55: #{tpu_custom_call.1} parent=5 // pred_region
        %s348 = ssub.s32 %s23, 1
        %s349 = sand.u32 %s36, 1
        %s350 = scalar_lea.sflag [#allocation4], %s349
        %s351 = sand.u32 %s36, 1
        %s352 = smul.addr %s351, 16
        %s353 = scalar_lea.vmem [#allocation3], %s352
        // Predicated region
        $region57: #{tpu_custom_call.1} parent=55 // pred_check
          %p354 = pneg %p49
        $region58: #{tpu_custom_call.1} parent=55 // pred_check_branch
          %356 = sbr.rel (%p354) target = $region60
        $region59: #{tpu_custom_call.1} parent=55 // pred_region
          %358 = dma.done %s350, 256
        $region60: #{tpu_custom_call.1} parent=55 // pred_fallthru
          _
        // Predicated region
        $region61: #{tpu_custom_call.1} parent=55 // pred_check
          %p359 = pneg %p91
        $region62: #{tpu_custom_call.1} parent=55 // pred_check_branch
          %361 = sbr.rel (%p359) target = $region64
        $region63: #{tpu_custom_call.1} parent=55 // pred_region
          %363 = dma.done [#allocation7], 128
        $region64: #{tpu_custom_call.1} parent=55 // pred_fallthru
          _
        // Predicated region
        $region65: #{tpu_custom_call.1} parent=55 // pred_check
          %p364 = pneg %p112
        $region66: #{tpu_custom_call.1} parent=55 // pred_check_branch
          %366 = sbr.rel (%p364) target = $region68
        $region67: #{tpu_custom_call.1} parent=55 // pred_region
          %368 = dma.done [#allocation7], 32
        $region68: #{tpu_custom_call.1} parent=55 // pred_fallthru
          _
        // Predicated region
        $region69: #{tpu_custom_call.1} parent=55 // pred_check
          %p369 = pneg %p154
        $region70: #{tpu_custom_call.1} parent=55 // pred_check_branch
          %371 = sbr.rel (%p369) target = $region72
        $region71: #{tpu_custom_call.1} parent=55 // pred_region
          %373 = dma.done [#allocation10], 32
        $region72: #{tpu_custom_call.1} parent=55 // pred_fallthru
          _
        // Predicated region
        $region73: #{tpu_custom_call.1} parent=55 // pred_check
          %p374 = pneg %p175
        $region74: #{tpu_custom_call.1} parent=55 // pred_check_branch
          %376 = sbr.rel (%p374) target = $region76
        $region75: #{tpu_custom_call.1} parent=55 // pred_region
          %378 = dma.done [#allocation10], 32
        $region76: #{tpu_custom_call.1} parent=55 // pred_fallthru
          _
        %s379 = sand.u32 %s36, 1
        %s380 = scalar_lea.sflag [#allocation4], %s379
        %s381 = sand.u32 %s36, 1
        %s382 = smul.addr %s381, 16
        %s383 = scalar_lea.vmem [#allocation3], %s382
        %p384 = pneg %p49
        %p385 = pneg %p46
        %p386 = pneg %p70
        %p387 = pneg %p67
        %p388 = pneg %p91
        %p389 = pneg %p88
        %p390 = pneg %p112
        %p391 = pneg %p109
        %p392 = pneg %p133
        %p393 = pneg %p130
        %p394 = pneg %p154
        %p395 = pneg %p151
        %p396 = pneg %p175
        %p397 = pneg %p172
        %p398 = pneg %p196
        %p399 = pneg %p193
        %p400 = pneg %p217
        %p401 = pneg %p214
        %p402 = pneg %p243
        %p403 = pneg %p240
        %s404 = sand.u32 %s230, 1
        %s405 = scalar_lea.sflag [#allocation5], %s404
        %s406 = sand.u32 %s230, 1
        %s407 = smul.addr %s406, 16
        %s408 = scalar_lea.vmem [#allocation12], %s407
        %v409 = vld [vmem:[%s1] sm:$0xff]
        %v410 = vld [vmem:[#allocation6] sm:$0xff]
        %v411 = vld [vmem:[%s353] sm:$0xff]
        %v412 = vld [vmem:[%s353 + $0x8] sm:$0xff]
        %v413 = vadd.f32 %v411, %v412
        %414 = vadd.xlane.f32.xlu0 %v413
        %v415 = vpop.xlane.xlu0 %414
        %v416 = vmul.f32 %v411, %v411
        %v417 = vmul.f32 %v412, %v412
        %v418 = vadd.f32 %v416, %v417
        %419 = vadd.xlane.f32.xlu0 %v418
        %v420 = vpop.xlane.xlu0 %419
        %vm421 = vcmask 7168
        %v422 = vsel %vm421, %v415, %v420
        %vm423 = vcmask 64512
        %v425 = vsel %vm423, %v410, 0
        %427 = vmatpush.msra.mxu0 0.0
        %428 = vmatpush.msra.mxu0 0.0
        %429 = vmatpush.msra.mxu0 0.0
        %430 = vmatpush.msra.mxu0 0.0
        %431 = vmatpush.msra.mxu0 0.0
        %432 = vmatpush.msra.mxu0 0.0
        %433 = vmatpush.msra.mxu0 0.0
        %434 = vmatpush.msra.mxu0 0.0
        %435 = vmatpush.msra.mxu0 0.0
        %436 = vmatpush.msra.mxu0 0.0
        %437 = vmatpush.msra.mxu0 0.0
        %438 = vmatpush.msra.mxu0 0.0
        %439 = vmatpush.msra.mxu0 0.0
        %440 = vmatpush.msra.mxu0 0.0
        %441 = vmatpush.msra.mxu0 0.0
        %442 = vmatpush.msra.mxu0 %v422
        %443 = vmatmul.f32.gmra.mxu0 %v425
        %v444 = vpop.f32.mrf.mxu0
        %v445 = vadd.f32 0.0, %v444
        %446 = vdwg.mxu0
        %v447 = vmul.f32 %v445, 0.001953125
        %v448 = vmul.f32 %v447, 512.0
        %v449 = vmul.f32 %v448, %v447
        %451 = vrot.lane.b32.xlu0 %v449, 1
        %v452 = vpop.permute.xlu0 %451
        %v454 = vsub.f32 %v445, %v452
        %v455 = vmul.f32 %v454, 0.0019569471
        %v456 = vmax.f32 %v455, 0.0
        %v457 = vrsqrt.pop %v456
        %v458 = vmul.f32 %v457, %v456
        %v459 = vmul.f32 %v458, %v457
        %v460 = vmul.f32 0.5, %v459
        %v461 = vsub.f32 1.5, %v460
        %v462 = vmul.f32 %v457, %v461
        %v463 = vmul.f32 %v456, %v462
        %vm464 = vcmp.eq.f32.partialorder %v456, inf
        %v465 = vsel %vm464, %v456, %v463
        %vm466 = vcmp.eq.f32.partialorder %v456, 0.0
        %v467 = vand.u32 %v456, 2147483648
        %v468 = vsel %vm466, %v467, %v465
        %v469 = vadd.f32 %v468, 1e-10
        %v470 = vrcp.pop %v469
        %v471 = vmul.f32 %v469, %v470
        %v472 = vsub.f32 1.0, %v471
        %v473 = vmul.f32 %v470, %v472
        %v474 = vadd.f32 %v470, %v473
        %vm475 = vweird.f32 %v469
        %vm476 = vweird.f32 %v470
        %vm477 = vmor %vm475, %vm476
        %v478 = vsel %vm477, %v470, %v474
        %v479 = vand.u32 2147483647, %v469
        %vm480 = vcmp.eq.f32.partialorder %v479, 8.507059e+37
        %v481 = vand.u32 %v469, 2147483648
        %v482 = vor.u32 1.1754944e-38, %v481
        %v483 = vsel %vm480, %v482, %v478
        %v484 = vmul.f32 1.0, %v483
        %486 = vset.pattern.permute.xlu0 0
        %487 = vperm.xlu0 %486, %v447
        %v488 = vpop.permute.xlu0 %487
        %v490 = vsub.f32 %v411, %v488
        %v491 = vsub.f32 %v412, %v488
        %493 = vrot.lane.b32.xlu0 %v409, 1
        %v494 = vpop.permute.xlu0 %493
        %v496 = vmul.f32 %v484, %v494
        %498 = vset.pattern.permute.xlu0 1
        %499 = vperm.xlu0 %498, %v496
        %v500 = vpop.permute.xlu0 %499
        %v502 = vmul.f32 %v490, %v500
        %v503 = vmul.f32 %v491, %v500
        %504 = vset.pattern.permute.xlu0 1
        %505 = vperm.xlu0 %504, %v409
        %v506 = vpop.permute.xlu0 %505
        %v508 = vadd.f32 %v502, %v506
        %v509 = vadd.f32 %v503, %v506
        %510 = vset.pattern.permute.xlu0 2
        %511 = vperm.xlu0 %510, %v409
        %v512 = vpop.permute.xlu0 %511
        %v514 = vmul.f32 %v508, %v512
        %v515 = vmul.f32 %v509, %v512
        %vm516 = vcmp.ge.f32.partialorder %v514, 0.0
        %vm517 = vcmp.ge.f32.partialorder %v515, 0.0
        %v518 = vsel %vm516, %v508, 0.0
        %v519 = vsel %vm517, %v509, 0.0
        %v520 = vsub.f32 %v508, %v518
        %v521 = vsub.f32 %v509, %v519
        %v522 = vrot.slane %v520, 4
        %v523 = vrot.slane %v521, 4
        %v524 = vadd.f32 %v518, %v522
        %v525 = vadd.f32 %v519, %v523
        %v526 = vld [vmem:[#allocation9] sm:$0x3]
        %vm527 = vcmask 31744
        %v529 = vsel %vm527, %v526, 0
        %vm531 = vcmask 1043456
        %v533 = vsel %vm531, %v524, 0
        %v536 = vsel %vm531, %v525, 0
        %538 = vmatpush.msra.mxu0 0.0
        %539 = vmatpush.msra.mxu0 0.0
        %540 = vmatpush.msra.mxu0 0.0
        %541 = vmatpush.msra.mxu0 0.0
        %542 = vmatpush.msra.mxu0 0.0
        %543 = vmatpush.msra.mxu0 0.0
        %544 = vmatpush.msra.mxu0 0.0
        %545 = vmatpush.msra.mxu0 0.0
        %546 = vmatpush.msra.mxu0 0.0
        %547 = vmatpush.msra.mxu0 0.0
        %548 = vmatpush.msra.mxu0 0.0
        %549 = vmatpush.msra.mxu0 0.0
        %550 = vmatpush.msra.mxu0 0.0
        %551 = vmatpush.msra.mxu0 0.0
        %552 = vmatpush.msra.mxu0 0.0
        %553 = vmatpush.msra.mxu0 %v533
        %554 = vmatmul.f32.gmra.mxu0 %v529
        %v555 = vpop.f32.mrf.mxu0
        %v556 = vadd.f32 0.0, %v555
        %557 = vdwg.mxu0
        %558 = vmatpush.msra.mxu0 0.0
        %559 = vmatpush.msra.mxu0 0.0
        %560 = vmatpush.msra.mxu0 0.0
        %561 = vmatpush.msra.mxu0 0.0
        %562 = vmatpush.msra.mxu0 0.0
        %563 = vmatpush.msra.mxu0 0.0
        %564 = vmatpush.msra.mxu0 0.0
        %565 = vmatpush.msra.mxu0 0.0
        %566 = vmatpush.msra.mxu0 0.0
        %567 = vmatpush.msra.mxu0 0.0
        %568 = vmatpush.msra.mxu0 0.0
        %569 = vmatpush.msra.mxu0 0.0
        %570 = vmatpush.msra.mxu0 0.0
        %571 = vmatpush.msra.mxu0 0.0
        %572 = vmatpush.msra.mxu0 0.0
        %573 = vmatpush.msra.mxu0 %v536
        %574 = vmatmul.f32.gmra.mxu0 %v529
        %v575 = vpop.f32.mrf.mxu0
        %v576 = vadd.f32 0.0, %v575
        %577 = vdwg.mxu0
        %v578 = vld [vmem:[#allocation11] sm:$0x3]
        %v579 = vrot.slane %v524, 4
        %v580 = vrot.slane %v525, 4
        %v582 = vsel %vm527, %v578, 0
        %v584 = vsel %vm531, %v579, 0
        %v586 = vsel %vm531, %v580, 0
        %588 = vmatpush.msra.mxu0 0.0
        %589 = vmatpush.msra.mxu0 0.0
        %590 = vmatpush.msra.mxu0 0.0
        %591 = vmatpush.msra.mxu0 0.0
        %592 = vmatpush.msra.mxu0 0.0
        %593 = vmatpush.msra.mxu0 0.0
        %594 = vmatpush.msra.mxu0 0.0
        %595 = vmatpush.msra.mxu0 0.0
        %596 = vmatpush.msra.mxu0 0.0
        %597 = vmatpush.msra.mxu0 0.0
        %598 = vmatpush.msra.mxu0 0.0
        %599 = vmatpush.msra.mxu0 0.0
        %600 = vmatpush.msra.mxu0 0.0
        %601 = vmatpush.msra.mxu0 0.0
        %602 = vmatpush.msra.mxu0 0.0
        %603 = vmatpush.msra.mxu0 %v584
        %604 = vmatmul.f32.gmra.mxu0 %v582
        %v605 = vpop.f32.mrf.mxu0
        %v606 = vadd.f32 0.0, %v605
        %607 = vdwg.mxu0
        %608 = vmatpush.msra.mxu0 0.0
        %609 = vmatpush.msra.mxu0 0.0
        %610 = vmatpush.msra.mxu0 0.0
        %611 = vmatpush.msra.mxu0 0.0
        %612 = vmatpush.msra.mxu0 0.0
        %613 = vmatpush.msra.mxu0 0.0
        %614 = vmatpush.msra.mxu0 0.0
        %615 = vmatpush.msra.mxu0 0.0
        %616 = vmatpush.msra.mxu0 0.0
        %617 = vmatpush.msra.mxu0 0.0
        %618 = vmatpush.msra.mxu0 0.0
        %619 = vmatpush.msra.mxu0 0.0
        %620 = vmatpush.msra.mxu0 0.0
        %621 = vmatpush.msra.mxu0 0.0
        %622 = vmatpush.msra.mxu0 0.0
        %623 = vmatpush.msra.mxu0 %v586
        %624 = vmatmul.f32.gmra.mxu0 %v582
        %v625 = vpop.f32.mrf.mxu0
        %v626 = vadd.f32 0.0, %v625
        %627 = vdwg.mxu0
        %628 = vrot.lane.b32.xlu0 %v556, 17
        %v629 = vpop.permute.xlu0 %628
        %630 = vrot.lane.b32.xlu0 %v576, 17
        %v631 = vpop.permute.xlu0 %630
        %v632 = vlaneseq
        %v633 = vand.u32 %v632, 127
        %vm634 = vcmp.lt.s32.totalorder %v633, 17
        %v635 = vsel %vm634, %v629, %v631
        %v636 = vsel %vm634, %v631, %v629
        %v637 = vld [vmem:[%s4] sm:$0x3]
        %v639 = vperm.slane %v637, 0
        %v640 = vperm.slane %v637, 1
        %v643 = vmul.f32 %v636, %v639
        %v644 = vmul.f32 %v635, %v640
        %645 = vst [vmem:[#allocation2] sm:$0x3] %v643
        %646 = vst [vmem:[#allocation2 + $0x8] sm:$0x3] %v644
        %647 = vrot.lane.b32.xlu0 %v556, 16
        %v648 = vpop.permute.xlu0 %647
        %649 = vrot.lane.b32.xlu0 %v576, 16
        %v650 = vpop.permute.xlu0 %649
        %vm651 = vcmp.lt.s32.totalorder %v633, 16
        %v652 = vsel %vm651, %v648, %v650
        %v653 = vsel %vm651, %v650, %v648
        %s654 = scalar_lea.vmem %s4, 2
        %v655 = vld [vmem:[%s654] sm:$0x3]
        %v657 = vperm.slane %v655, 0
        %v658 = vperm.slane %v655, 1
        %v661 = vmul.f32 %v653, %v657
        %v662 = vmul.f32 %v652, %v658
        %v665 = vrot.slane %v661, 6
        %v666 = vrot.slane %v662, 6
        %669 = vst [vmem:[#allocation2] sm:$0xc] %v665
        %670 = vst [vmem:[#allocation2 + $0x8] sm:$0xc] %v666
        %671 = vrot.lane.b32.xlu0 %v556, 15
        %v672 = vpop.permute.xlu0 %671
        %673 = vrot.lane.b32.xlu0 %v576, 15
        %v674 = vpop.permute.xlu0 %673
        %vm675 = vcmp.lt.s32.totalorder %v633, 15
        %v676 = vsel %vm675, %v672, %v674
        %v677 = vsel %vm675, %v674, %v672
        %s678 = scalar_lea.vmem %s4, 4
        %v679 = vld [vmem:[%s678] sm:$0x3]
        %v681 = vperm.slane %v679, 0
        %v682 = vperm.slane %v679, 1
        %v685 = vmul.f32 %v677, %v681
        %v686 = vmul.f32 %v676, %v682
        %v689 = vrot.slane %v685, 4
        %v690 = vrot.slane %v686, 4
        %693 = vst [vmem:[#allocation2] sm:$0x30] %v689
        %694 = vst [vmem:[#allocation2 + $0x8] sm:$0x30] %v690
        %695 = vrot.lane.b32.xlu0 %v556, 1
        %v696 = vpop.permute.xlu0 %695
        %697 = vrot.lane.b32.xlu0 %v576, 1
        %v698 = vpop.permute.xlu0 %697
        %vm699 = vcmp.lt.s32.totalorder %v633, 1
        %v700 = vsel %vm699, %v696, %v698
        %v701 = vsel %vm699, %v698, %v696
        %s702 = scalar_lea.vmem %s4, 6
        %v703 = vld [vmem:[%s702] sm:$0x3]
        %v705 = vperm.slane %v703, 0
        %v706 = vperm.slane %v703, 1
        %v709 = vmul.f32 %v701, %v705
        %v710 = vmul.f32 %v700, %v706
        %v713 = vrot.slane %v709, 2
        %v714 = vrot.slane %v710, 2
        %717 = vst [vmem:[#allocation2] sm:$0xc0] %v713
        %718 = vst [vmem:[#allocation2 + $0x8] sm:$0xc0] %v714
        %s719 = scalar_lea.vmem %s4, 8
        %v720 = vld [vmem:[%s719] sm:$0x3]
        %v722 = vperm.slane %v720, 0
        %v723 = vperm.slane %v720, 1
        %v726 = vmul.f32 %v556, %v722
        %v727 = vmul.f32 %v576, %v723
        %728 = vst [vmem:[#allocation2 + $0x10] sm:$0x3] %v726
        %729 = vst [vmem:[#allocation2 + $0x18] sm:$0x3] %v727
        %730 = vrot.lane.b32.xlu0 %v556, 127
        %v731 = vpop.permute.xlu0 %730
        %732 = vrot.lane.b32.xlu0 %v576, 127
        %v733 = vpop.permute.xlu0 %732
        %vm734 = vcmp.lt.s32.totalorder %v633, 127
        %v735 = vsel %vm734, %v731, %v733
        %v736 = vsel %vm734, %v733, %v731
        %s737 = scalar_lea.vmem %s4, 10
        %v738 = vld [vmem:[%s737] sm:$0x3]
        %v740 = vperm.slane %v738, 0
        %v741 = vperm.slane %v738, 1
        %v744 = vmul.f32 %v735, %v740
        %v745 = vmul.f32 %v736, %v741
        %v748 = vrot.slane %v744, 6
        %v749 = vrot.slane %v745, 6
        %752 = vst [vmem:[#allocation2 + $0x10] sm:$0xc] %v748
        %753 = vst [vmem:[#allocation2 + $0x18] sm:$0xc] %v749
        %754 = vrot.lane.b32.xlu0 %v556, 113
        %v755 = vpop.permute.xlu0 %754
        %756 = vrot.lane.b32.xlu0 %v576, 113
        %v757 = vpop.permute.xlu0 %756
        %vm758 = vcmp.lt.s32.totalorder %v633, 113
        %v759 = vsel %vm758, %v755, %v757
        %v760 = vsel %vm758, %v757, %v755
        %s761 = scalar_lea.vmem %s4, 12
        %v762 = vld [vmem:[%s761] sm:$0x3]
        %v764 = vperm.slane %v762, 0
        %v765 = vperm.slane %v762, 1
        %v768 = vmul.f32 %v759, %v764
        %v769 = vmul.f32 %v760, %v765
        %v772 = vrot.slane %v768, 4
        %v773 = vrot.slane %v769, 4
        %776 = vst [vmem:[#allocation2 + $0x10] sm:$0x30] %v772
        %777 = vst [vmem:[#allocation2 + $0x18] sm:$0x30] %v773
        %778 = vrot.lane.b32.xlu0 %v556, 112
        %v779 = vpop.permute.xlu0 %778
        %780 = vrot.lane.b32.xlu0 %v576, 112
        %v781 = vpop.permute.xlu0 %780
        %vm782 = vcmp.lt.s32.totalorder %v633, 112
        %v783 = vsel %vm782, %v779, %v781
        %v784 = vsel %vm782, %v781, %v779
        %s785 = scalar_lea.vmem %s4, 14
        %v786 = vld [vmem:[%s785] sm:$0x3]
        %v788 = vperm.slane %v786, 0
        %v789 = vperm.slane %v786, 1
        %v792 = vmul.f32 %v783, %v788
        %v793 = vmul.f32 %v784, %v789
        %v796 = vrot.slane %v792, 2
        %v797 = vrot.slane %v793, 2
        %800 = vst [vmem:[#allocation2 + $0x10] sm:$0xc0] %v796
        %801 = vst [vmem:[#allocation2 + $0x18] sm:$0xc0] %v797
        %802 = vrot.lane.b32.xlu0 %v556, 111
        %v803 = vpop.permute.xlu0 %802
        %804 = vrot.lane.b32.xlu0 %v576, 111
        %v805 = vpop.permute.xlu0 %804
        %vm806 = vcmp.lt.s32.totalorder %v633, 111
        %v807 = vsel %vm806, %v803, %v805
        %v808 = vsel %vm806, %v805, %v803
        %s809 = scalar_lea.vmem %s4, 16
        %v810 = vld [vmem:[%s809] sm:$0x3]
        %v812 = vperm.slane %v810, 0
        %v813 = vperm.slane %v810, 1
        %v816 = vmul.f32 %v807, %v812
        %v817 = vmul.f32 %v808, %v813
        %818 = vst [vmem:[#allocation2 + $0x20] sm:$0x3] %v816
        %819 = vst [vmem:[#allocation2 + $0x28] sm:$0x3] %v817
        %v820 = vld [vmem:[%s7] sm:$0xff]
        %v821 = vld [vmem:[#allocation2] sm:$0xff]
        %v822 = vld [vmem:[#allocation2 + $0x8] sm:$0xff]
        %v823 = vld [vmem:[#allocation2 + $0x10] sm:$0xff]
        %v824 = vld [vmem:[#allocation2 + $0x18] sm:$0xff]
        %v825 = vld [vmem:[#allocation2 + $0x20] sm:$0x3]
        %v826 = vld [vmem:[#allocation2 + $0x28] sm:$0x3]
        %827 = vset.pattern.permute.xlu0 3
        %828 = vperm.xlu0 %827, %v409
        %v829 = vpop.permute.xlu0 %828
        %vm831 = vcmask 146432
        %v833 = vsel %vm831, %v820, 0
        %vm835 = vcmask 1041408
        %v837 = vsel %vm835, %v825, 0
        %v840 = vsel %vm835, %v826, 0
        %842 = vmatpush.msra.mxu0 0.0
        %843 = vmatpush.msra.mxu0 0.0
        %844 = vmatpush.msra.mxu0 0.0
        %845 = vmatpush.msra.mxu0 0.0
        %846 = vmatpush.msra.mxu0 0.0
        %847 = vmatpush.msra.mxu0 0.0
        %848 = vmatpush.msra.mxu0 0.0
        %849 = vmatpush.msra.mxu0 0.0
        %850 = vmatpush.msra.mxu0 0.0
        %851 = vmatpush.msra.mxu0 0.0
        %852 = vmatpush.msra.mxu0 0.0
        %853 = vmatpush.msra.mxu0 0.0
        %854 = vmatpush.msra.mxu0 0.0
        %855 = vmatpush.msra.mxu0 %v837
        %856 = vmatpush.msra.mxu0 %v823
        %857 = vmatpush.msra.mxu0 %v821
        %858 = vmatmul.f32.gmra.mxu0 %v833
        %v859 = vpop.f32.mrf.mxu0
        %v860 = vadd.f32 %v829, %v859
        %861 = vdwg.mxu0
        %862 = vmatpush.msra.mxu0 0.0
        %863 = vmatpush.msra.mxu0 0.0
        %864 = vmatpush.msra.mxu0 0.0
        %865 = vmatpush.msra.mxu0 0.0
        %866 = vmatpush.msra.mxu0 0.0
        %867 = vmatpush.msra.mxu0 0.0
        %868 = vmatpush.msra.mxu0 0.0
        %869 = vmatpush.msra.mxu0 0.0
        %870 = vmatpush.msra.mxu0 0.0
        %871 = vmatpush.msra.mxu0 0.0
        %872 = vmatpush.msra.mxu0 0.0
        %873 = vmatpush.msra.mxu0 0.0
        %874 = vmatpush.msra.mxu0 0.0
        %875 = vmatpush.msra.mxu0 %v840
        %876 = vmatpush.msra.mxu0 %v824
        %877 = vmatpush.msra.mxu0 %v822
        %878 = vmatmul.f32.gmra.mxu0 %v833
        %v879 = vpop.f32.mrf.mxu0
        %v880 = vadd.f32 %v829, %v879
        %881 = vdwg.mxu0
        %v882 = vld [vmem:[%s8] sm:$0xff]
        %vm883 = vcmask 15360
        %v885 = vsel %vm883, %v882, 0
        %v888 = vsel %vm835, %v606, 0
        %v891 = vsel %vm835, %v626, 0
        %893 = vmatpush.msra.mxu0 0.0
        %894 = vmatpush.msra.mxu0 0.0
        %895 = vmatpush.msra.mxu0 0.0
        %896 = vmatpush.msra.mxu0 0.0
        %897 = vmatpush.msra.mxu0 0.0
        %898 = vmatpush.msra.mxu0 0.0
        %899 = vmatpush.msra.mxu0 0.0
        %900 = vmatpush.msra.mxu0 0.0
        %901 = vmatpush.msra.mxu0 0.0
        %902 = vmatpush.msra.mxu0 0.0
        %903 = vmatpush.msra.mxu0 0.0
        %904 = vmatpush.msra.mxu0 0.0
        %905 = vmatpush.msra.mxu0 0.0
        %906 = vmatpush.msra.mxu0 0.0
        %907 = vmatpush.msra.mxu0 0.0
        %908 = vmatpush.msra.mxu0 %v888
        %909 = vmatmul.f32.gmra.mxu0 %v885
        %v910 = vpop.f32.mrf.mxu0
        %v911 = vadd.f32 0.0, %v910
        %912 = vdwg.mxu0
        %913 = vmatpush.msra.mxu0 0.0
        %914 = vmatpush.msra.mxu0 0.0
        %915 = vmatpush.msra.mxu0 0.0
        %916 = vmatpush.msra.mxu0 0.0
        %917 = vmatpush.msra.mxu0 0.0
        %918 = vmatpush.msra.mxu0 0.0
        %919 = vmatpush.msra.mxu0 0.0
        %920 = vmatpush.msra.mxu0 0.0
        %921 = vmatpush.msra.mxu0 0.0
        %922 = vmatpush.msra.mxu0 0.0
        %923 = vmatpush.msra.mxu0 0.0
        %924 = vmatpush.msra.mxu0 0.0
        %925 = vmatpush.msra.mxu0 0.0
        %926 = vmatpush.msra.mxu0 0.0
        %927 = vmatpush.msra.mxu0 0.0
        %928 = vmatpush.msra.mxu0 %v891
        %929 = vmatmul.f32.gmra.mxu0 %v885
        %v930 = vpop.f32.mrf.mxu0
        %v931 = vadd.f32 0.0, %v930
        %932 = vdwg.mxu0
        %v933 = vadd.f32 %v860, %v880
        %934 = vadd.xlane.f32.xlu0 %v933
        %v935 = vpop.xlane.xlu0 %934
        %v936 = vmul.f32 %v935, 0.00390625
        %v937 = vadd.f32 %v911, %v931
        %938 = vadd.xlane.f32.xlu0 %v937
        %v939 = vpop.xlane.xlu0 %938
        %v940 = vmul.f32 %v939, 0.00390625
        %v941 = vrot.slane %v936, 4
        %v942 = vmax.f32 %v936, %v941
        %v943 = vrot.slane %v942, 2
        %v944 = vmax.f32 %v942, %v943
        %v945 = vrot.slane %v944, 1
        %v946 = vmax.f32 %v944, %v945
        %s947 = vtos %v946
        %v948 = vrot.slane %v940, 4
        %v949 = vmax.f32 %v940, %v948
        %v950 = vrot.slane %v949, 2
        %v951 = vmax.f32 %v949, %v950
        %v952 = vrot.slane %v951, 1
        %v953 = vmax.f32 %v951, %v952
        %s954 = vtos %v953
        %s955 = smax.f32 %s947, %s954
        %v956 = vstv %s955
        %v957 = vsub.f32 %v936, %v956
        %v958 = vmul.f32 %v957, 1.442695
        %v959 = vpow.pop %v958
        %v960 = vsub.f32 %v940, %v956
        %v961 = vmul.f32 %v960, 1.442695
        %v962 = vpow.pop %v961
        %v963 = vsel %vm421, %v959, 0.0
        %964 = vadd.xlane.f32.xlu0 %v963
        %v965 = vpop.xlane.xlu0 %964
        %v966 = vrot.slane %v965, 4
        %v967 = vadd.f32 %v965, %v966
        %v968 = vrot.slane %v967, 2
        %v969 = vadd.f32 %v967, %v968
        %v970 = vrot.slane %v969, 1
        %v971 = vadd.f32 %v969, %v970
        %s972 = vtos %v971
        %v973 = vsel %vm421, %v962, 0.0
        %974 = vadd.xlane.f32.xlu0 %v973
        %v975 = vpop.xlane.xlu0 %974
        %v976 = vrot.slane %v975, 4
        %v977 = vadd.f32 %v975, %v976
        %v978 = vrot.slane %v977, 2
        %v979 = vadd.f32 %v977, %v978
        %v980 = vrot.slane %v979, 1
        %v981 = vadd.f32 %v979, %v980
        %s982 = vtos %v981
        %s983 = sadd.f32 %s972, %s982
        %v984 = vstv %s983
        %v985 = vrcp.pop %v984
        %v986 = vmul.f32 %v984, %v985
        %v987 = vsub.f32 1.0, %v986
        %v988 = vmul.f32 %v985, %v987
        %v989 = vadd.f32 %v985, %v988
        %vm990 = vweird.f32 %v984
        %vm991 = vweird.f32 %v985
        %vm992 = vmor %vm990, %vm991
        %v993 = vsel %vm992, %v985, %v989
        %v994 = vand.u32 2147483647, %v984
        %vm995 = vcmp.eq.f32.partialorder %v994, 8.507059e+37
        %v996 = vand.u32 %v984, 2147483648
        %v997 = vor.u32 1.1754944e-38, %v996
        %v998 = vsel %vm995, %v997, %v993
        %s999 = vtos %v998
        %v1000 = vstv %s999
        %v1001 = vmul.f32 %v959, %v1000
        %v1002 = vmul.f32 %v860, %v1001
        %v1003 = vmul.f32 %v880, %v1001
        %v1004 = vmul.f32 %v962, %v1000
        %v1005 = vmul.f32 %v911, %v1004
        %v1006 = vmul.f32 %v931, %v1004
        %v1007 = vadd.f32 %v1002, %v1005
        %v1008 = vadd.f32 %v1003, %v1006
        %1009 = vst [vmem:[%s408] sm:$0xff] %v1007
        %1010 = vst [vmem:[%s408 + $0x8] sm:$0xff] %v1008
        %s1011 = sand.u32 %s230, 1
        %s1012 = scalar_lea.sflag [#allocation5], %s1011
        %s1013 = sand.u32 %s230, 1
        %s1014 = smul.addr %s1013, 16
        %s1015 = scalar_lea.vmem [#allocation12], %s1014
        // Predicated region
        $region77: #{tpu_custom_call.1} parent=55 // pred_check
          %p1016 = pneg %p240
        $region78: #{tpu_custom_call.1} parent=55 // pred_check_branch
          %1018 = sbr.rel (%p1016) target = $region80
        $region79: #{tpu_custom_call.1} parent=55 // pred_region
          %1020 = vsyncadd %s1012, 0
          %s1021 = smul.addr %s28, 2
          %s1022 = smul.addr %s1021, 8
          %s1023 = scalar_lea.hbm %s9, %s1022
          %s1025 = sshll.u32 %s1015, 4
          %s1026 = int_to_ptr.vmem [resolvable:$true] %s1025
          %s1027 = sshll.u32 %s1023, 4
          %s1028 = int_to_ptr.hbm [resolvable:$true] %s1027
          %1030 = dma.vmem_to_hbm [thread:$0]  %s1026, 256, %s1028, %s1012
        $region80: #{tpu_custom_call.1} parent=55 // pred_fallthru
          _
      $region56: #{tpu_custom_call.1} parent=5 // pred_fallthru
        _
      %p1031 = scmp.le.s32.totalorder 2, %s23
      // Predicated region
      $region81: #{tpu_custom_call.1} parent=5 // pred_check
        %p1032 = pneg %p1031
      $region82: #{tpu_custom_call.1} parent=5 // pred_check_branch
        %1034 = sbr.rel (%p1032) target = $region84
      $region83: #{tpu_custom_call.1} parent=5 // pred_region
        %s1035 = ssub.s32 %s23, 2
        // Predicated region
        $region85: #{tpu_custom_call.1} parent=83 // pred_check
          %p1036 = pneg %p246
        $region86: #{tpu_custom_call.1} parent=83 // pred_check_branch
          %1038 = sbr.rel (%p1036) target = $region88
        $region87: #{tpu_custom_call.1} parent=83 // pred_region
          %s1039 = sand.u32 %s231, 1
          %s1040 = scalar_lea.sflag [#allocation5], %s1039
          %s1041 = sand.u32 %s231, 1
          %s1042 = smul.addr %s1041, 16
          %s1043 = scalar_lea.vmem [#allocation12], %s1042
          %1045 = dma.done %s1040, 256
        $region88: #{tpu_custom_call.1} parent=83 // pred_fallthru
          _
      $region84: #{tpu_custom_call.1} parent=5 // pred_fallthru
        _
    $region6: #{tpu_custom_call.1} parent=1 // loop_footer
      %s27 = sadd.s32 1, %s23
    $region7: #{tpu_custom_call.1} parent=1 // loop_footer_branch
      %22 = sbr.rel target = $region3
    $region8: #{tpu_custom_call.1} parent=1 // loop_exit
      _
    %1046 = vsyncpa [#allocation4], 1
    %s1047 = scalar_lea.sflag [#allocation4], 1
    %1048 = vsyncpa %s1047, 1
    %1049 = vsyncpa [#allocation7], 1
    %1050 = vsyncpa [#allocation10], 1
    %1051 = vsyncpa [#allocation5], 1
    %s1052 = scalar_lea.sflag [#allocation5], 1
    %1053 = vsyncpa %s1052, 1

</llo_original>
